<compile_context>
chip_gen: v6e
topology: v6e:2x2x1
jax: 0.10.0
libtpu: 0.0.40
codegen_flags: <defaults>
</compile_context>

<pallas_src>
import jax
import jax.numpy as jnp
from jax import lax
from jax.experimental import pallas as pl
from jax.experimental.pallas import tpu as pltpu

CLS_DIM = 2
BBOX_DIM = 8
REID_DIM = 256
PACKED_DIM = CLS_DIM + BBOX_DIM + REID_DIM          # 266
LANE = 128
PACKED_PAD = ((PACKED_DIM + LANE - 1) // LANE) * LANE  # 384 (lane-dense output)


# ----------------------------------------------------------------------------
# Kernel: spatial mean -> one packed matmul -> softmax / (folded) denorm / L2
# ----------------------------------------------------------------------------
def sipn_head_kernel(feat_ref,   # (TN, C, HW) f32
                     w_ref,      # (C, P)  packed [cls | bbox*std | reid | 0pad]
                     b_ref,      # (1, P)  packed [bcls | bbox*std+mean | breid | 0]
                     out_ref):   # (TN, P) packed [cls_prob | bbox | reid_l2 | 0]
    # fc7 = tail(...).mean(3).mean(2): reduce the contiguous HW axis (no HBM
    # transpose was needed to get channels onto the matmul K axis).
    fc7 = jnp.mean(feat_ref[...], axis=-1)                         # (TN, C)

    # Single lane-dense MXU push for all three heads.
    z = jnp.dot(fc7, w_ref[...],
                preferred_element_type=jnp.float32) + b_ref[...]   # (TN, P)

    col = lax.broadcasted_iota(jnp.int32, z.shape, 1)
    cls_mask = col < CLS_DIM
    bbox_mask = (col >= CLS_DIM) & (col < CLS_DIM + BBOX_DIM)
    reid_mask = (col >= CLS_DIM + BBOX_DIM) & (col < PACKED_DIM)

    # cls_prob = softmax(cls_score, 1) over the 2 cls columns.
    z_cls = jnp.where(cls_mask, z, -jnp.inf)
    m = jnp.max(z_cls, axis=-1, keepdims=True)
    e = jnp.exp(z_cls - m)                                         # 0 outside cls
    inv_sum = pl.reciprocal(jnp.sum(e, axis=-1, keepdims=True), approx=True)
    cls_part = e * inv_sum

    # bbox_pred.mul(stds).add(means) is folded into W/b at param-build time.
    bbox_part = jnp.where(bbox_mask, z, 0.0)

    # reid_feat = F.normalize(reid, dim=1, eps=1e-12).
    z_reid = jnp.where(reid_mask, z, 0.0)
    norm_sq = jnp.sum(z_reid * z_reid, axis=-1, keepdims=True)
    inv_norm = lax.rsqrt(jnp.maximum(norm_sq, 1e-24))   # == 1 / max(norm, 1e-12)
    reid_part = z_reid * inv_norm

    out_ref[...] = cls_part + bbox_part + reid_part


# ----------------------------------------------------------------------------
# Wrapper: tiling over RoIs, resident weights, lane-dense packed output
# ----------------------------------------------------------------------------
def _pick_block_rows(n, c, hw, itemsize=4, vmem_budget_bytes=24 << 20):
    """RoI rows per grid step; the double-buffered (TN, C, HW) feature tile is
    sized for the smallest per-core VMEM (v7x: 64 MiB physical / 32 MiB default
    scoped). v5e/v6e could take a larger budget + vmem_limit_bytes, but this
    value is safe everywhere (e.g. C=2048, HW=49 -> TN=24)."""
    per_row = c * hw * itemsize
    tn = vmem_budget_bytes // (2 * per_row)
    tn = max(8, min(128, (tn // 8) * 8))
    return min(tn, ((n + 7) // 8) * 8)


def sipn_gallery_head(feat_nchw, w_packed, b_packed):
    """feat_nchw: (N, C, H, W) f32 — output of self.tail for N RoIs.
    Returns (cls_prob (N,2), bbox_pred (N,8) de-normalized, reid_feat (N,256))."""
    n, c, h, w = feat_nchw.shape
    hw = h * w
    p = w_packed.shape[1]

    # Contiguous reshape only — the full feature map is never transposed/copied.
    feat = feat_nchw.reshape(n, c, hw)

    tn = _pick_block_rows(n, c, hw)
    n_pad = pl.cdiv(n, tn) * tn
    if n_pad != n:
        feat = jnp.pad(feat, ((0, n_pad - n), (0, 0), (0, 0)))

    out = pl.pallas_call(
        sipn_head_kernel,
        out_shape=jax.ShapeDtypeStruct((n_pad, p), jnp.float32),
        grid=(n_pad // tn,),
        in_specs=[
            pl.BlockSpec((tn, c, hw), lambda i: (i, 0, 0)),  # pipelined RoI tile
            pl.BlockSpec((c, p), lambda i: (0, 0)),          # VMEM-resident weights
            pl.BlockSpec((1, p), lambda i: (0, 0)),          # VMEM-resident bias
        ],
        out_specs=pl.BlockSpec((tn, p), lambda i: (i, 0)),   # lane-dense (384) out
        compiler_params=pltpu.CompilerParams(
            dimension_semantics=("parallel",)),              # v7x: 2 TCs share RoIs
    )(feat, w_packed, b_packed)

    cls_prob = out[:n, :CLS_DIM]
    bbox_pred = out[:n, CLS_DIM:CLS_DIM + BBOX_DIM]
    reid_feat = out[:n, CLS_DIM + BBOX_DIM:PACKED_DIM]
    return cls_prob, bbox_pred, reid_feat


# ----------------------------------------------------------------------------
# Parameters (mirrors SIPN.init_linear_weight(trun=False)) + offline packing
# ----------------------------------------------------------------------------
def make_raw_params(key, fc7_channels, reid_feat_dim=REID_DIM):
    k_cls, k_bbox, k_reid = jax.random.split(key, 3)
    return dict(
        w_cls=0.01 * jax.random.normal(k_cls, (CLS_DIM, fc7_channels), jnp.float32),
        b_cls=jnp.zeros((CLS_DIM,), jnp.float32),
        w_bbox=0.001 * jax.random.normal(k_bbox, (BBOX_DIM, fc7_channels), jnp.float32),
        b_bbox=jnp.zeros((BBOX_DIM,), jnp.float32),
        w_reid=0.01 * jax.random.normal(k_reid, (reid_feat_dim, fc7_channels), jnp.float32),
        b_reid=jnp.zeros((reid_feat_dim,), jnp.float32),
        means=jnp.tile(jnp.array([0.0, 0.0, 0.0, 0.0], jnp.float32), 2),
        stds=jnp.tile(jnp.array([0.1, 0.1, 0.2, 0.2], jnp.float32), 2),
    )


def pack_params(raw):
    """(out,in) torch Linear weights -> one (C, 384) packed, lane-padded weight;
    bbox de-normalization folded into its columns/bias (done once, offline)."""
    wc = raw['w_cls'].T                                      # (C, 2)
    wb = raw['w_bbox'].T * raw['stds'][None, :]              # (C, 8)  * stds
    wr = raw['w_reid'].T                                     # (C, 256)
    bc = raw['b_cls']
    bb = raw['b_bbox'] * raw['stds'] + raw['means']
    br = raw['b_reid']
    w_packed = jnp.concatenate([wc, wb, wr], axis=1)         # (C, 266)
    b_packed = jnp.concatenate([bc, bb, br])[None, :]        # (1, 266)
    pad = PACKED_PAD - PACKED_DIM
    w_packed = jnp.pad(w_packed, ((0, 0), (0, pad)))
    b_packed = jnp.pad(b_packed, ((0, 0), (0, pad)))
    return w_packed, b_packed


# ----------------------------------------------------------------------------
# Pure-JAX reference (PyTorch semantics) for verification
# ----------------------------------------------------------------------------
def reference(feat_nchw, raw):
    fc7 = feat_nchw.mean(axis=(2, 3))                        # (N, C)
    cls = fc7 @ raw['w_cls'].T + raw['b_cls']
    cls_prob = jax.nn.softmax(cls, axis=1)
    bbox = (fc7 @ raw['w_bbox'].T + raw['b_bbox']) * raw['stds'] + raw['means']
    reid = fc7 @ raw['w_reid'].T + raw['b_reid']
    reid = reid / jnp.maximum(jnp.linalg.norm(reid, axis=1, keepdims=True), 1e-12)
    return cls_prob, bbox, reid


if __name__ == "__main__":
    key = jax.random.PRNGKey(0)
    k_feat, k_params = jax.random.split(key)

    # Small synthetic shapes: N=8 RoIs, fc7_channels=256, tail spatial 4x4.
    N, C, H, W = 8, 256, 4, 4
    feat_nchw = jax.random.normal(k_feat, (N, C, H, W), dtype=jnp.float32)

    raw = make_raw_params(k_params, fc7_channels=C)
    w_packed, b_packed = pack_params(raw)

    cls_prob, bbox_pred, reid_feat = jax.block_until_ready(
        sipn_gallery_head(feat_nchw, w_packed, b_packed))

    ref_cls, ref_bbox, ref_reid = reference(feat_nchw, raw)
    # cls/reid tolerances account for EUP approx-reciprocal / rsqrt paths.
    assert jnp.allclose(cls_prob, ref_cls, atol=1e-3), "cls_prob mismatch"
    assert jnp.allclose(bbox_pred, ref_bbox, atol=1e-5), "bbox_pred mismatch"
    assert jnp.allclose(reid_feat, ref_reid, atol=1e-3), "reid_feat mismatch"

    print("KERNEL_OK")
</pallas_src>

<mosaic_0001>
module attributes {stable_mosaic.version = 11 : i64} {
  func.func @sipn_head_kernel(%arg0: i32, %arg1: memref<8x256x16xf32, #tpu.memory_space<vmem>>, %arg2: memref<256x384xf32, #tpu.memory_space<vmem>>, %arg3: memref<1x384xf32, #tpu.memory_space<vmem>>, %arg4: memref<8x384xf32, #tpu.memory_space<vmem>>) attributes {dimension_semantics = [#tpu.dimension_semantics<parallel>], iteration_bounds = array<i64: 1>, scalar_prefetch = 0 : i64, scratch_operands = 0 : i64, tpu.core_type = #tpu.core_type<tc>, window_params = [{transform_indices = @transform_0, window_bounds = array<i64: 8, 256, 16>}, {pipeline_mode = #tpu.pipeline_mode<synchronous>, transform_indices = @transform_1, window_bounds = array<i64: 256, 384>}, {pipeline_mode = #tpu.pipeline_mode<synchronous>, transform_indices = @transform_2, window_bounds = array<i64: 1, 384>}, {transform_indices = @transform_3, window_bounds = array<i64: 8, 384>}]} {
    %c0 = arith.constant 0 : index
    %c0_0 = arith.constant 0 : index
    %c0_1 = arith.constant 0 : index
    %0 = vector.load %arg1[%c0, %c0_0, %c0_1] : memref<8x256x16xf32, #tpu.memory_space<vmem>>, vector<8x256x16xf32>
    %cst = arith.constant dense<0.000000e+00> : vector<8x256xf32>
    %1 = vector.multi_reduction <add>, %0, %cst [2] : vector<8x256x16xf32> to vector<8x256xf32>
    %cst_2 = arith.constant 1.600000e+01 : f32
    %2 = vector.broadcast %cst_2 : f32 to vector<8x256xf32>
    %3 = arith.divf %1, %2 : vector<8x256xf32>
    %c0_3 = arith.constant 0 : index
    %c0_4 = arith.constant 0 : index
    %4 = vector.load %arg2[%c0_3, %c0_4] : memref<256x384xf32, #tpu.memory_space<vmem>>, vector<256x384xf32>
    %cst_5 = arith.constant dense<0.000000e+00> : vector<8x384xf32>
    %5 = tpu.matmul %3, %4, %cst_5 {dimension_numbers = #tpu.dot_dimension_numbers<[1], [0], [0], [1], [0, 0, 1, 1], [], []>} : vector<8x256xf32>, vector<256x384xf32>, vector<8x384xf32> -> vector<8x384xf32>
    %c0_6 = arith.constant 0 : index
    %c0_7 = arith.constant 0 : index
    %6 = vector.load %arg3[%c0_6, %c0_7] : memref<1x384xf32, #tpu.memory_space<vmem>>, vector<1x384xf32>
    %7 = vector.broadcast %6 : vector<1x384xf32> to vector<8x384xf32>
    %8 = arith.addf %5, %7 : vector<8x384xf32>
    %9 = tpu.iota {dimensions = array<i32: 1>} : vector<8x384xi32>
    %c2_i32 = arith.constant 2 : i32
    %10 = vector.broadcast %c2_i32 : i32 to vector<8x384xi32>
    %11 = arith.cmpi slt, %9, %10 : vector<8x384xi32>
    %c2_i32_8 = arith.constant 2 : i32
    %12 = vector.broadcast %c2_i32_8 : i32 to vector<8x384xi32>
    %13 = arith.cmpi sge, %9, %12 : vector<8x384xi32>
    %c10_i32 = arith.constant 10 : i32
    %14 = vector.broadcast %c10_i32 : i32 to vector<8x384xi32>
    %15 = arith.cmpi slt, %9, %14 : vector<8x384xi32>
    %16 = arith.andi %13, %15 : vector<8x384xi1>
    %c10_i32_9 = arith.constant 10 : i32
    %17 = vector.broadcast %c10_i32_9 : i32 to vector<8x384xi32>
    %18 = arith.cmpi sge, %9, %17 : vector<8x384xi32>
    %c266_i32 = arith.constant 266 : i32
    %19 = vector.broadcast %c266_i32 : i32 to vector<8x384xi32>
    %20 = arith.cmpi slt, %9, %19 : vector<8x384xi32>
    %21 = arith.andi %18, %20 : vector<8x384xi1>
    %cst_10 = arith.constant 0xFF800000 : f32
    %22 = vector.broadcast %cst_10 : f32 to vector<8x384xf32>
    %23 = arith.select %11, %8, %22 : vector<8x384xi1>, vector<8x384xf32>
    %cst_11 = arith.constant dense<0xFF800000> : vector<8xf32>
    %24 = vector.multi_reduction <maximumf>, %23, %cst_11 [1] : vector<8x384xf32> to vector<8xf32>
    %25 = vector.shape_cast %24 : vector<8xf32> to vector<8x1xf32>
    %26 = vector.broadcast %25 : vector<8x1xf32> to vector<8x384xf32>
    %27 = arith.subf %23, %26 : vector<8x384xf32>
    %28 = math.exp %27 : vector<8x384xf32>
    %cst_12 = arith.constant dense<0.000000e+00> : vector<8xf32>
    %29 = vector.multi_reduction <add>, %28, %cst_12 [1] : vector<8x384xf32> to vector<8xf32>
    %30 = vector.shape_cast %29 : vector<8xf32> to vector<8x1xf32>
    %31 = tpu.reciprocal %30 {approx = true} : vector<8x1xf32> -> vector<8x1xf32>
    %32 = vector.broadcast %31 : vector<8x1xf32> to vector<8x384xf32>
    %33 = arith.mulf %28, %32 : vector<8x384xf32>
    %cst_13 = arith.constant 0.000000e+00 : f32
    %34 = vector.broadcast %cst_13 : f32 to vector<8x384xf32>
    %35 = arith.select %16, %8, %34 : vector<8x384xi1>, vector<8x384xf32>
    %cst_14 = arith.constant 0.000000e+00 : f32
    %36 = vector.broadcast %cst_14 : f32 to vector<8x384xf32>
    %37 = arith.select %21, %8, %36 : vector<8x384xi1>, vector<8x384xf32>
    %38 = arith.mulf %37, %37 : vector<8x384xf32>
    %cst_15 = arith.constant dense<0.000000e+00> : vector<8xf32>
    %39 = vector.multi_reduction <add>, %38, %cst_15 [1] : vector<8x384xf32> to vector<8xf32>
    %40 = vector.shape_cast %39 : vector<8xf32> to vector<8x1xf32>
    %cst_16 = arith.constant 1.000000e-24 : f32
    %41 = vector.broadcast %cst_16 : f32 to vector<8x1xf32>
    %42 = arith.maximumf %40, %41 : vector<8x1xf32>
    %43 = math.rsqrt %42 : vector<8x1xf32>
    %44 = vector.broadcast %43 : vector<8x1xf32> to vector<8x384xf32>
    %45 = arith.mulf %37, %44 : vector<8x384xf32>
    %46 = arith.addf %33, %35 : vector<8x384xf32>
    %47 = arith.addf %46, %45 : vector<8x384xf32>
    %c0_17 = arith.constant 0 : index
    %c0_18 = arith.constant 0 : index
    %48 = vector.load %arg4[%c0_17, %c0_18] : memref<8x384xf32, #tpu.memory_space<vmem>>, vector<8x384xf32>
    tpu.vector_store %arg4[%c0_17, %c0_18], %47 {strides = array<i32>} : memref<8x384xf32, #tpu.memory_space<vmem>>, vector<8x384xf32>,
    return
  }
  func.func @transform_0(%arg0: i32) -> (i32, i32, i32) {
    %c0_i32 = arith.constant 0 : i32
    %c0_i32_0 = arith.constant 0 : i32
    %c0_i32_1 = arith.constant 0 : i32
    return %arg0, %c0_i32, %c0_i32_0 : i32, i32, i32
  }
  func.func @transform_1(%arg0: i32) -> (i32, i32) {
    %c0_i32 = arith.constant 0 : i32
    %c0_i32_0 = arith.constant 0 : i32
    %c0_i32_1 = arith.constant 0 : i32
    return %c0_i32, %c0_i32_0 : i32, i32
  }
  func.func @transform_2(%arg0: i32) -> (i32, i32) {
    %c0_i32 = arith.constant 0 : i32
    %c0_i32_0 = arith.constant 0 : i32
    %c0_i32_1 = arith.constant 0 : i32
    return %c0_i32, %c0_i32_0 : i32, i32
  }
  func.func @transform_3(%arg0: i32) -> (i32, i32) {
    %c0_i32 = arith.constant 0 : i32
    %c0_i32_0 = arith.constant 0 : i32
    return %arg0, %c0_i32 : i32, i32
  }
}

</mosaic_0001>

<llo_original>
// kernel: tpu_custom_call.1
$region0: #{tpu_custom_call.1}
  #allocation0 [shape = 'u32[]', space=smem, size = 0x4, offset = 0x4, fixed_abs, tag = 'smem constant byte address 0x4 - core index']
  #allocation1 [shape = 'u32[144,128]{1,0:T(1,128)}', space=vmem, size = 0x12000, scoped, tag = 'internal scratch']
  %s0 = inlined_call_operand.vmem [shape: f32[8,256,16], index: 0, kind: input, shape index: {}]
  %s1 = inlined_call_operand.vmem [shape: f32[256,384], index: 1, kind: input, shape index: {}]
  %s2 = inlined_call_operand.vmem [shape: f32[1,384], index: 2, kind: input, shape index: {}]
  %s3 = inlined_call_operand.hbm [shape: f32[8,384], index: 3, kind: output, shape index: {}]
  %s4 = sld [smem:[#allocation0]]
  $region22: #{tpu_custom_call.1} parent=0
    _
  %s6 = ssub.s32 1, %s4
  %s7 = scalar_select 0, %s6, %s4
  $region1: #{tpu_custom_call.1} parent=0
    #allocation2 [shape = 'u8[12288]{0}', space=vmem, size = 0x3000, scoped, tag = 'output window, operand 0, single buffered']
    #allocation3 [shape = 's32[1]{0}', space=sflag, size = 0x4, scoped, tag = 'scoped memory for tpu_custom_call.1']
    %8 = vsyncpa [#allocation3], 0
    // Predicated region
    $region2: #{tpu_custom_call.1} parent=1 // pred_check
      _
    $region3: #{tpu_custom_call.1} parent=1 // pred_check_branch
      %10 = sbr.rel (0) target = $region5
    $region4: #{tpu_custom_call.1} parent=1 // pred_region
      _
    $region5: #{tpu_custom_call.1} parent=1 // pred_fallthru
      _
    // Predicated region
    $region6: #{tpu_custom_call.1} parent=1 // pred_check
      _
    $region7: #{tpu_custom_call.1} parent=1 // pred_check_branch
      %12 = sbr.rel (0) target = $region9
    $region8: #{tpu_custom_call.1} parent=1 // pred_region
      _
    $region9: #{tpu_custom_call.1} parent=1 // pred_fallthru
      _
    // Predicated region
    $region10: #{tpu_custom_call.1} parent=1 // pred_check
      _
    $region11: #{tpu_custom_call.1} parent=1 // pred_check_branch
      %14 = sbr.rel (0) target = $region13
    $region12: #{tpu_custom_call.1} parent=1 // pred_region
      _
    $region13: #{tpu_custom_call.1} parent=1 // pred_fallthru
      _
    %v15 = vld [vmem:[%s0] sm:$0xff]
    %v16 = vld [vmem:[%s0 + $0x8] sm:$0xff]
    %v17 = vld [vmem:[%s0 + $0x10] sm:$0xff]
    %v18 = vld [vmem:[%s0 + $0x18] sm:$0xff]
    %v19 = vld [vmem:[%s0 + $0x20] sm:$0xff]
    %v20 = vld [vmem:[%s0 + $0x28] sm:$0xff]
    %v21 = vld [vmem:[%s0 + $0x30] sm:$0xff]
    %v22 = vld [vmem:[%s0 + $0x38] sm:$0xff]
    %v23 = vld [vmem:[%s0 + $0x40] sm:$0xff]
    %v24 = vld [vmem:[%s0 + $0x48] sm:$0xff]
    %v25 = vld [vmem:[%s0 + $0x50] sm:$0xff]
    %v26 = vld [vmem:[%s0 + $0x58] sm:$0xff]
    %v27 = vld [vmem:[%s0 + $0x60] sm:$0xff]
    %v28 = vld [vmem:[%s0 + $0x68] sm:$0xff]
    %v29 = vld [vmem:[%s0 + $0x70] sm:$0xff]
    %v30 = vld [vmem:[%s0 + $0x78] sm:$0xff]
    %v31 = vld [vmem:[%s0 + $0x80] sm:$0xff]
    %v32 = vld [vmem:[%s0 + $0x88] sm:$0xff]
    %v33 = vld [vmem:[%s0 + $0x90] sm:$0xff]
    %v34 = vld [vmem:[%s0 + $0x98] sm:$0xff]
    %v35 = vld [vmem:[%s0 + $0xa0] sm:$0xff]
    %v36 = vld [vmem:[%s0 + $0xa8] sm:$0xff]
    %v37 = vld [vmem:[%s0 + $0xb0] sm:$0xff]
    %v38 = vld [vmem:[%s0 + $0xb8] sm:$0xff]
    %v39 = vld [vmem:[%s0 + $0xc0] sm:$0xff]
    %v40 = vld [vmem:[%s0 + $0xc8] sm:$0xff]
    %v41 = vld [vmem:[%s0 + $0xd0] sm:$0xff]
    %v42 = vld [vmem:[%s0 + $0xd8] sm:$0xff]
    %v43 = vld [vmem:[%s0 + $0xe0] sm:$0xff]
    %v44 = vld [vmem:[%s0 + $0xe8] sm:$0xff]
    %v45 = vld [vmem:[%s0 + $0xf0] sm:$0xff]
    %v46 = vld [vmem:[%s0 + $0xf8] sm:$0xff]
    %v47 = vld [vmem:[%s0 + $0x100] sm:$0xff]
    %v48 = vld [vmem:[%s0 + $0x108] sm:$0xff]
    %v49 = vld [vmem:[%s0 + $0x110] sm:$0xff]
    %v50 = vld [vmem:[%s0 + $0x118] sm:$0xff]
    %v51 = vld [vmem:[%s0 + $0x120] sm:$0xff]
    %v52 = vld [vmem:[%s0 + $0x128] sm:$0xff]
    %v53 = vld [vmem:[%s0 + $0x130] sm:$0xff]
    %v54 = vld [vmem:[%s0 + $0x138] sm:$0xff]
    %v55 = vld [vmem:[%s0 + $0x140] sm:$0xff]
    %v56 = vld [vmem:[%s0 + $0x148] sm:$0xff]
    %v57 = vld [vmem:[%s0 + $0x150] sm:$0xff]
    %v58 = vld [vmem:[%s0 + $0x158] sm:$0xff]
    %v59 = vld [vmem:[%s0 + $0x160] sm:$0xff]
    %v60 = vld [vmem:[%s0 + $0x168] sm:$0xff]
    %v61 = vld [vmem:[%s0 + $0x170] sm:$0xff]
    %v62 = vld [vmem:[%s0 + $0x178] sm:$0xff]
    %v63 = vld [vmem:[%s0 + $0x180] sm:$0xff]
    %v64 = vld [vmem:[%s0 + $0x188] sm:$0xff]
    %v65 = vld [vmem:[%s0 + $0x190] sm:$0xff]
    %v66 = vld [vmem:[%s0 + $0x198] sm:$0xff]
    %v67 = vld [vmem:[%s0 + $0x1a0] sm:$0xff]
    %v68 = vld [vmem:[%s0 + $0x1a8] sm:$0xff]
    %v69 = vld [vmem:[%s0 + $0x1b0] sm:$0xff]
    %v70 = vld [vmem:[%s0 + $0x1b8] sm:$0xff]
    %v71 = vld [vmem:[%s0 + $0x1c0] sm:$0xff]
    %v72 = vld [vmem:[%s0 + $0x1c8] sm:$0xff]
    %v73 = vld [vmem:[%s0 + $0x1d0] sm:$0xff]
    %v74 = vld [vmem:[%s0 + $0x1d8] sm:$0xff]
    %v75 = vld [vmem:[%s0 + $0x1e0] sm:$0xff]
    %v76 = vld [vmem:[%s0 + $0x1e8] sm:$0xff]
    %v77 = vld [vmem:[%s0 + $0x1f0] sm:$0xff]
    %v78 = vld [vmem:[%s0 + $0x1f8] sm:$0xff]
    %v79 = vld [vmem:[%s0 + $0x200] sm:$0xff]
    %v80 = vld [vmem:[%s0 + $0x208] sm:$0xff]
    %v81 = vld [vmem:[%s0 + $0x210] sm:$0xff]
    %v82 = vld [vmem:[%s0 + $0x218] sm:$0xff]
    %v83 = vld [vmem:[%s0 + $0x220] sm:$0xff]
    %v84 = vld [vmem:[%s0 + $0x228] sm:$0xff]
    %v85 = vld [vmem:[%s0 + $0x230] sm:$0xff]
    %v86 = vld [vmem:[%s0 + $0x238] sm:$0xff]
    %v87 = vld [vmem:[%s0 + $0x240] sm:$0xff]
    %v88 = vld [vmem:[%s0 + $0x248] sm:$0xff]
    %v89 = vld [vmem:[%s0 + $0x250] sm:$0xff]
    %v90 = vld [vmem:[%s0 + $0x258] sm:$0xff]
    %v91 = vld [vmem:[%s0 + $0x260] sm:$0xff]
    %v92 = vld [vmem:[%s0 + $0x268] sm:$0xff]
    %v93 = vld [vmem:[%s0 + $0x270] sm:$0xff]
    %v94 = vld [vmem:[%s0 + $0x278] sm:$0xff]
    %v95 = vld [vmem:[%s0 + $0x280] sm:$0xff]
    %v96 = vld [vmem:[%s0 + $0x288] sm:$0xff]
    %v97 = vld [vmem:[%s0 + $0x290] sm:$0xff]
    %v98 = vld [vmem:[%s0 + $0x298] sm:$0xff]
    %v99 = vld [vmem:[%s0 + $0x2a0] sm:$0xff]
    %v100 = vld [vmem:[%s0 + $0x2a8] sm:$0xff]
    %v101 = vld [vmem:[%s0 + $0x2b0] sm:$0xff]
    %v102 = vld [vmem:[%s0 + $0x2b8] sm:$0xff]
    %v103 = vld [vmem:[%s0 + $0x2c0] sm:$0xff]
    %v104 = vld [vmem:[%s0 + $0x2c8] sm:$0xff]
    %v105 = vld [vmem:[%s0 + $0x2d0] sm:$0xff]
    %v106 = vld [vmem:[%s0 + $0x2d8] sm:$0xff]
    %v107 = vld [vmem:[%s0 + $0x2e0] sm:$0xff]
    %v108 = vld [vmem:[%s0 + $0x2e8] sm:$0xff]
    %v109 = vld [vmem:[%s0 + $0x2f0] sm:$0xff]
    %v110 = vld [vmem:[%s0 + $0x2f8] sm:$0xff]
    %v111 = vld [vmem:[%s0 + $0x300] sm:$0xff]
    %v112 = vld [vmem:[%s0 + $0x308] sm:$0xff]
    %v113 = vld [vmem:[%s0 + $0x310] sm:$0xff]
    %v114 = vld [vmem:[%s0 + $0x318] sm:$0xff]
    %v115 = vld [vmem:[%s0 + $0x320] sm:$0xff]
    %v116 = vld [vmem:[%s0 + $0x328] sm:$0xff]
    %v117 = vld [vmem:[%s0 + $0x330] sm:$0xff]
    %v118 = vld [vmem:[%s0 + $0x338] sm:$0xff]
    %v119 = vld [vmem:[%s0 + $0x340] sm:$0xff]
    %v120 = vld [vmem:[%s0 + $0x348] sm:$0xff]
    %v121 = vld [vmem:[%s0 + $0x350] sm:$0xff]
    %v122 = vld [vmem:[%s0 + $0x358] sm:$0xff]
    %v123 = vld [vmem:[%s0 + $0x360] sm:$0xff]
    %v124 = vld [vmem:[%s0 + $0x368] sm:$0xff]
    %v125 = vld [vmem:[%s0 + $0x370] sm:$0xff]
    %v126 = vld [vmem:[%s0 + $0x378] sm:$0xff]
    %v127 = vld [vmem:[%s0 + $0x380] sm:$0xff]
    %v128 = vld [vmem:[%s0 + $0x388] sm:$0xff]
    %v129 = vld [vmem:[%s0 + $0x390] sm:$0xff]
    %v130 = vld [vmem:[%s0 + $0x398] sm:$0xff]
    %v131 = vld [vmem:[%s0 + $0x3a0] sm:$0xff]
    %v132 = vld [vmem:[%s0 + $0x3a8] sm:$0xff]
    %v133 = vld [vmem:[%s0 + $0x3b0] sm:$0xff]
    %v134 = vld [vmem:[%s0 + $0x3b8] sm:$0xff]
    %v135 = vld [vmem:[%s0 + $0x3c0] sm:$0xff]
    %v136 = vld [vmem:[%s0 + $0x3c8] sm:$0xff]
    %v137 = vld [vmem:[%s0 + $0x3d0] sm:$0xff]
    %v138 = vld [vmem:[%s0 + $0x3d8] sm:$0xff]
    %v139 = vld [vmem:[%s0 + $0x3e0] sm:$0xff]
    %v140 = vld [vmem:[%s0 + $0x3e8] sm:$0xff]
    %v141 = vld [vmem:[%s0 + $0x3f0] sm:$0xff]
    %v142 = vld [vmem:[%s0 + $0x3f8] sm:$0xff]
    %v143 = vld [vmem:[%s0 + $0x400] sm:$0xff]
    %v144 = vld [vmem:[%s0 + $0x408] sm:$0xff]
    %v145 = vld [vmem:[%s0 + $0x410] sm:$0xff]
    %v146 = vld [vmem:[%s0 + $0x418] sm:$0xff]
    %v147 = vld [vmem:[%s0 + $0x420] sm:$0xff]
    %v148 = vld [vmem:[%s0 + $0x428] sm:$0xff]
    %v149 = vld [vmem:[%s0 + $0x430] sm:$0xff]
    %v150 = vld [vmem:[%s0 + $0x438] sm:$0xff]
    %v151 = vld [vmem:[%s0 + $0x440] sm:$0xff]
    %v152 = vld [vmem:[%s0 + $0x448] sm:$0xff]
    %v153 = vld [vmem:[%s0 + $0x450] sm:$0xff]
    %v154 = vld [vmem:[%s0 + $0x458] sm:$0xff]
    %v155 = vld [vmem:[%s0 + $0x460] sm:$0xff]
    %v156 = vld [vmem:[%s0 + $0x468] sm:$0xff]
    %v157 = vld [vmem:[%s0 + $0x470] sm:$0xff]
    %v158 = vld [vmem:[%s0 + $0x478] sm:$0xff]
    %v159 = vld [vmem:[%s0 + $0x480] sm:$0xff]
    %v160 = vld [vmem:[%s0 + $0x488] sm:$0xff]
    %v161 = vld [vmem:[%s0 + $0x490] sm:$0xff]
    %v162 = vld [vmem:[%s0 + $0x498] sm:$0xff]
    %v163 = vld [vmem:[%s0 + $0x4a0] sm:$0xff]
    %v164 = vld [vmem:[%s0 + $0x4a8] sm:$0xff]
    %v165 = vld [vmem:[%s0 + $0x4b0] sm:$0xff]
    %v166 = vld [vmem:[%s0 + $0x4b8] sm:$0xff]
    %v167 = vld [vmem:[%s0 + $0x4c0] sm:$0xff]
    %v168 = vld [vmem:[%s0 + $0x4c8] sm:$0xff]
    %v169 = vld [vmem:[%s0 + $0x4d0] sm:$0xff]
    %v170 = vld [vmem:[%s0 + $0x4d8] sm:$0xff]
    %v171 = vld [vmem:[%s0 + $0x4e0] sm:$0xff]
    %v172 = vld [vmem:[%s0 + $0x4e8] sm:$0xff]
    %v173 = vld [vmem:[%s0 + $0x4f0] sm:$0xff]
    %v174 = vld [vmem:[%s0 + $0x4f8] sm:$0xff]
    %v175 = vld [vmem:[%s0 + $0x500] sm:$0xff]
    %v176 = vld [vmem:[%s0 + $0x508] sm:$0xff]
    %v177 = vld [vmem:[%s0 + $0x510] sm:$0xff]
    %v178 = vld [vmem:[%s0 + $0x518] sm:$0xff]
    %v179 = vld [vmem:[%s0 + $0x520] sm:$0xff]
    %v180 = vld [vmem:[%s0 + $0x528] sm:$0xff]
    %v181 = vld [vmem:[%s0 + $0x530] sm:$0xff]
    %v182 = vld [vmem:[%s0 + $0x538] sm:$0xff]
    %v183 = vld [vmem:[%s0 + $0x540] sm:$0xff]
    %v184 = vld [vmem:[%s0 + $0x548] sm:$0xff]
    %v185 = vld [vmem:[%s0 + $0x550] sm:$0xff]
    %v186 = vld [vmem:[%s0 + $0x558] sm:$0xff]
    %v187 = vld [vmem:[%s0 + $0x560] sm:$0xff]
    %v188 = vld [vmem:[%s0 + $0x568] sm:$0xff]
    %v189 = vld [vmem:[%s0 + $0x570] sm:$0xff]
    %v190 = vld [vmem:[%s0 + $0x578] sm:$0xff]
    %v191 = vld [vmem:[%s0 + $0x580] sm:$0xff]
    %v192 = vld [vmem:[%s0 + $0x588] sm:$0xff]
    %v193 = vld [vmem:[%s0 + $0x590] sm:$0xff]
    %v194 = vld [vmem:[%s0 + $0x598] sm:$0xff]
    %v195 = vld [vmem:[%s0 + $0x5a0] sm:$0xff]
    %v196 = vld [vmem:[%s0 + $0x5a8] sm:$0xff]
    %v197 = vld [vmem:[%s0 + $0x5b0] sm:$0xff]
    %v198 = vld [vmem:[%s0 + $0x5b8] sm:$0xff]
    %v199 = vld [vmem:[%s0 + $0x5c0] sm:$0xff]
    %v200 = vld [vmem:[%s0 + $0x5c8] sm:$0xff]
    %v201 = vld [vmem:[%s0 + $0x5d0] sm:$0xff]
    %v202 = vld [vmem:[%s0 + $0x5d8] sm:$0xff]
    %v203 = vld [vmem:[%s0 + $0x5e0] sm:$0xff]
    %v204 = vld [vmem:[%s0 + $0x5e8] sm:$0xff]
    %v205 = vld [vmem:[%s0 + $0x5f0] sm:$0xff]
    %v206 = vld [vmem:[%s0 + $0x5f8] sm:$0xff]
    %v207 = vld [vmem:[%s0 + $0x600] sm:$0xff]
    %v208 = vld [vmem:[%s0 + $0x608] sm:$0xff]
    %v209 = vld [vmem:[%s0 + $0x610] sm:$0xff]
    %v210 = vld [vmem:[%s0 + $0x618] sm:$0xff]
    %v211 = vld [vmem:[%s0 + $0x620] sm:$0xff]
    %v212 = vld [vmem:[%s0 + $0x628] sm:$0xff]
    %v213 = vld [vmem:[%s0 + $0x630] sm:$0xff]
    %v214 = vld [vmem:[%s0 + $0x638] sm:$0xff]
    %v215 = vld [vmem:[%s0 + $0x640] sm:$0xff]
    %v216 = vld [vmem:[%s0 + $0x648] sm:$0xff]
    %v217 = vld [vmem:[%s0 + $0x650] sm:$0xff]
    %v218 = vld [vmem:[%s0 + $0x658] sm:$0xff]
    %v219 = vld [vmem:[%s0 + $0x660] sm:$0xff]
    %v220 = vld [vmem:[%s0 + $0x668] sm:$0xff]
    %v221 = vld [vmem:[%s0 + $0x670] sm:$0xff]
    %v222 = vld [vmem:[%s0 + $0x678] sm:$0xff]
    %v223 = vld [vmem:[%s0 + $0x680] sm:$0xff]
    %v224 = vld [vmem:[%s0 + $0x688] sm:$0xff]
    %v225 = vld [vmem:[%s0 + $0x690] sm:$0xff]
    %v226 = vld [vmem:[%s0 + $0x698] sm:$0xff]
    %v227 = vld [vmem:[%s0 + $0x6a0] sm:$0xff]
    %v228 = vld [vmem:[%s0 + $0x6a8] sm:$0xff]
    %v229 = vld [vmem:[%s0 + $0x6b0] sm:$0xff]
    %v230 = vld [vmem:[%s0 + $0x6b8] sm:$0xff]
    %v231 = vld [vmem:[%s0 + $0x6c0] sm:$0xff]
    %v232 = vld [vmem:[%s0 + $0x6c8] sm:$0xff]
    %v233 = vld [vmem:[%s0 + $0x6d0] sm:$0xff]
    %v234 = vld [vmem:[%s0 + $0x6d8] sm:$0xff]
    %v235 = vld [vmem:[%s0 + $0x6e0] sm:$0xff]
    %v236 = vld [vmem:[%s0 + $0x6e8] sm:$0xff]
    %v237 = vld [vmem:[%s0 + $0x6f0] sm:$0xff]
    %v238 = vld [vmem:[%s0 + $0x6f8] sm:$0xff]
    %v239 = vld [vmem:[%s0 + $0x700] sm:$0xff]
    %v240 = vld [vmem:[%s0 + $0x708] sm:$0xff]
    %v241 = vld [vmem:[%s0 + $0x710] sm:$0xff]
    %v242 = vld [vmem:[%s0 + $0x718] sm:$0xff]
    %v243 = vld [vmem:[%s0 + $0x720] sm:$0xff]
    %v244 = vld [vmem:[%s0 + $0x728] sm:$0xff]
    %v245 = vld [vmem:[%s0 + $0x730] sm:$0xff]
    %v246 = vld [vmem:[%s0 + $0x738] sm:$0xff]
    %v247 = vld [vmem:[%s0 + $0x740] sm:$0xff]
    %v248 = vld [vmem:[%s0 + $0x748] sm:$0xff]
    %v249 = vld [vmem:[%s0 + $0x750] sm:$0xff]
    %v250 = vld [vmem:[%s0 + $0x758] sm:$0xff]
    %v251 = vld [vmem:[%s0 + $0x760] sm:$0xff]
    %v252 = vld [vmem:[%s0 + $0x768] sm:$0xff]
    %v253 = vld [vmem:[%s0 + $0x770] sm:$0xff]
    %v254 = vld [vmem:[%s0 + $0x778] sm:$0xff]
    %v255 = vld [vmem:[%s0 + $0x780] sm:$0xff]
    %v256 = vld [vmem:[%s0 + $0x788] sm:$0xff]
    %v257 = vld [vmem:[%s0 + $0x790] sm:$0xff]
    %v258 = vld [vmem:[%s0 + $0x798] sm:$0xff]
    %v259 = vld [vmem:[%s0 + $0x7a0] sm:$0xff]
    %v260 = vld [vmem:[%s0 + $0x7a8] sm:$0xff]
    %v261 = vld [vmem:[%s0 + $0x7b0] sm:$0xff]
    %v262 = vld [vmem:[%s0 + $0x7b8] sm:$0xff]
    %v263 = vld [vmem:[%s0 + $0x7c0] sm:$0xff]
    %v264 = vld [vmem:[%s0 + $0x7c8] sm:$0xff]
    %v265 = vld [vmem:[%s0 + $0x7d0] sm:$0xff]
    %v266 = vld [vmem:[%s0 + $0x7d8] sm:$0xff]
    %v267 = vld [vmem:[%s0 + $0x7e0] sm:$0xff]
    %v268 = vld [vmem:[%s0 + $0x7e8] sm:$0xff]
    %v269 = vld [vmem:[%s0 + $0x7f0] sm:$0xff]
    %v270 = vld [vmem:[%s0 + $0x7f8] sm:$0xff]
    %vm271 = vcmask 130048
    %v272 = vsel %vm271, %v15, 0.0
    %273 = vadd.xlane.f32.xlu0 %v272
    %v274 = vpop.xlane.xlu0 %273
    %v275 = vsel %vm271, %v16, 0.0
    %276 = vadd.xlane.f32.xlu0 %v275
    %v277 = vpop.xlane.xlu0 %276
    %v278 = vsel %vm271, %v17, 0.0
    %279 = vadd.xlane.f32.xlu0 %v278
    %v280 = vpop.xlane.xlu0 %279
    %v281 = vsel %vm271, %v18, 0.0
    %282 = vadd.xlane.f32.xlu0 %v281
    %v283 = vpop.xlane.xlu0 %282
    %v284 = vsel %vm271, %v19, 0.0
    %285 = vadd.xlane.f32.xlu0 %v284
    %v286 = vpop.xlane.xlu0 %285
    %v287 = vsel %vm271, %v20, 0.0
    %288 = vadd.xlane.f32.xlu0 %v287
    %v289 = vpop.xlane.xlu0 %288
    %v290 = vsel %vm271, %v21, 0.0
    %291 = vadd.xlane.f32.xlu0 %v290
    %v292 = vpop.xlane.xlu0 %291
    %v293 = vsel %vm271, %v22, 0.0
    %294 = vadd.xlane.f32.xlu0 %v293
    %v295 = vpop.xlane.xlu0 %294
    %v296 = vsel %vm271, %v23, 0.0
    %297 = vadd.xlane.f32.xlu0 %v296
    %v298 = vpop.xlane.xlu0 %297
    %v299 = vsel %vm271, %v24, 0.0
    %300 = vadd.xlane.f32.xlu0 %v299
    %v301 = vpop.xlane.xlu0 %300
    %v302 = vsel %vm271, %v25, 0.0
    %303 = vadd.xlane.f32.xlu0 %v302
    %v304 = vpop.xlane.xlu0 %303
    %v305 = vsel %vm271, %v26, 0.0
    %306 = vadd.xlane.f32.xlu0 %v305
    %v307 = vpop.xlane.xlu0 %306
    %v308 = vsel %vm271, %v27, 0.0
    %309 = vadd.xlane.f32.xlu0 %v308
    %v310 = vpop.xlane.xlu0 %309
    %v311 = vsel %vm271, %v28, 0.0
    %312 = vadd.xlane.f32.xlu0 %v311
    %v313 = vpop.xlane.xlu0 %312
    %v314 = vsel %vm271, %v29, 0.0
    %315 = vadd.xlane.f32.xlu0 %v314
    %v316 = vpop.xlane.xlu0 %315
    %v317 = vsel %vm271, %v30, 0.0
    %318 = vadd.xlane.f32.xlu0 %v317
    %v319 = vpop.xlane.xlu0 %318
    %v320 = vsel %vm271, %v31, 0.0
    %321 = vadd.xlane.f32.xlu0 %v320
    %v322 = vpop.xlane.xlu0 %321
    %v323 = vsel %vm271, %v32, 0.0
    %324 = vadd.xlane.f32.xlu0 %v323
    %v325 = vpop.xlane.xlu0 %324
    %v326 = vsel %vm271, %v33, 0.0
    %327 = vadd.xlane.f32.xlu0 %v326
    %v328 = vpop.xlane.xlu0 %327
    %v329 = vsel %vm271, %v34, 0.0
    %330 = vadd.xlane.f32.xlu0 %v329
    %v331 = vpop.xlane.xlu0 %330
    %v332 = vsel %vm271, %v35, 0.0
    %333 = vadd.xlane.f32.xlu0 %v332
    %v334 = vpop.xlane.xlu0 %333
    %v335 = vsel %vm271, %v36, 0.0
    %336 = vadd.xlane.f32.xlu0 %v335
    %v337 = vpop.xlane.xlu0 %336
    %v338 = vsel %vm271, %v37, 0.0
    %339 = vadd.xlane.f32.xlu0 %v338
    %v340 = vpop.xlane.xlu0 %339
    %v341 = vsel %vm271, %v38, 0.0
    %342 = vadd.xlane.f32.xlu0 %v341
    %v343 = vpop.xlane.xlu0 %342
    %v344 = vsel %vm271, %v39, 0.0
    %345 = vadd.xlane.f32.xlu0 %v344
    %v346 = vpop.xlane.xlu0 %345
    %v347 = vsel %vm271, %v40, 0.0
    %348 = vadd.xlane.f32.xlu0 %v347
    %v349 = vpop.xlane.xlu0 %348
    %v350 = vsel %vm271, %v41, 0.0
    %351 = vadd.xlane.f32.xlu0 %v350
    %v352 = vpop.xlane.xlu0 %351
    %v353 = vsel %vm271, %v42, 0.0
    %354 = vadd.xlane.f32.xlu0 %v353
    %v355 = vpop.xlane.xlu0 %354
    %v356 = vsel %vm271, %v43, 0.0
    %357 = vadd.xlane.f32.xlu0 %v356
    %v358 = vpop.xlane.xlu0 %357
    %v359 = vsel %vm271, %v44, 0.0
    %360 = vadd.xlane.f32.xlu0 %v359
    %v361 = vpop.xlane.xlu0 %360
    %v362 = vsel %vm271, %v45, 0.0
    %363 = vadd.xlane.f32.xlu0 %v362
    %v364 = vpop.xlane.xlu0 %363
    %v365 = vsel %vm271, %v46, 0.0
    %366 = vadd.xlane.f32.xlu0 %v365
    %v367 = vpop.xlane.xlu0 %366
    %v368 = vsel %vm271, %v47, 0.0
    %369 = vadd.xlane.f32.xlu0 %v368
    %v370 = vpop.xlane.xlu0 %369
    %v371 = vsel %vm271, %v48, 0.0
    %372 = vadd.xlane.f32.xlu0 %v371
    %v373 = vpop.xlane.xlu0 %372
    %v374 = vsel %vm271, %v49, 0.0
    %375 = vadd.xlane.f32.xlu0 %v374
    %v376 = vpop.xlane.xlu0 %375
    %v377 = vsel %vm271, %v50, 0.0
    %378 = vadd.xlane.f32.xlu0 %v377
    %v379 = vpop.xlane.xlu0 %378
    %v380 = vsel %vm271, %v51, 0.0
    %381 = vadd.xlane.f32.xlu0 %v380
    %v382 = vpop.xlane.xlu0 %381
    %v383 = vsel %vm271, %v52, 0.0
    %384 = vadd.xlane.f32.xlu0 %v383
    %v385 = vpop.xlane.xlu0 %384
    %v386 = vsel %vm271, %v53, 0.0
    %387 = vadd.xlane.f32.xlu0 %v386
    %v388 = vpop.xlane.xlu0 %387
    %v389 = vsel %vm271, %v54, 0.0
    %390 = vadd.xlane.f32.xlu0 %v389
    %v391 = vpop.xlane.xlu0 %390
    %v392 = vsel %vm271, %v55, 0.0
    %393 = vadd.xlane.f32.xlu0 %v392
    %v394 = vpop.xlane.xlu0 %393
    %v395 = vsel %vm271, %v56, 0.0
    %396 = vadd.xlane.f32.xlu0 %v395
    %v397 = vpop.xlane.xlu0 %396
    %v398 = vsel %vm271, %v57, 0.0
    %399 = vadd.xlane.f32.xlu0 %v398
    %v400 = vpop.xlane.xlu0 %399
    %v401 = vsel %vm271, %v58, 0.0
    %402 = vadd.xlane.f32.xlu0 %v401
    %v403 = vpop.xlane.xlu0 %402
    %v404 = vsel %vm271, %v59, 0.0
    %405 = vadd.xlane.f32.xlu0 %v404
    %v406 = vpop.xlane.xlu0 %405
    %v407 = vsel %vm271, %v60, 0.0
    %408 = vadd.xlane.f32.xlu0 %v407
    %v409 = vpop.xlane.xlu0 %408
    %v410 = vsel %vm271, %v61, 0.0
    %411 = vadd.xlane.f32.xlu0 %v410
    %v412 = vpop.xlane.xlu0 %411
    %v413 = vsel %vm271, %v62, 0.0
    %414 = vadd.xlane.f32.xlu0 %v413
    %v415 = vpop.xlane.xlu0 %414
    %v416 = vsel %vm271, %v63, 0.0
    %417 = vadd.xlane.f32.xlu0 %v416
    %v418 = vpop.xlane.xlu0 %417
    %v419 = vsel %vm271, %v64, 0.0
    %420 = vadd.xlane.f32.xlu0 %v419
    %v421 = vpop.xlane.xlu0 %420
    %v422 = vsel %vm271, %v65, 0.0
    %423 = vadd.xlane.f32.xlu0 %v422
    %v424 = vpop.xlane.xlu0 %423
    %v425 = vsel %vm271, %v66, 0.0
    %426 = vadd.xlane.f32.xlu0 %v425
    %v427 = vpop.xlane.xlu0 %426
    %v428 = vsel %vm271, %v67, 0.0
    %429 = vadd.xlane.f32.xlu0 %v428
    %v430 = vpop.xlane.xlu0 %429
    %v431 = vsel %vm271, %v68, 0.0
    %432 = vadd.xlane.f32.xlu0 %v431
    %v433 = vpop.xlane.xlu0 %432
    %v434 = vsel %vm271, %v69, 0.0
    %435 = vadd.xlane.f32.xlu0 %v434
    %v436 = vpop.xlane.xlu0 %435
    %v437 = vsel %vm271, %v70, 0.0
    %438 = vadd.xlane.f32.xlu0 %v437
    %v439 = vpop.xlane.xlu0 %438
    %v440 = vsel %vm271, %v71, 0.0
    %441 = vadd.xlane.f32.xlu0 %v440
    %v442 = vpop.xlane.xlu0 %441
    %v443 = vsel %vm271, %v72, 0.0
    %444 = vadd.xlane.f32.xlu0 %v443
    %v445 = vpop.xlane.xlu0 %444
    %v446 = vsel %vm271, %v73, 0.0
    %447 = vadd.xlane.f32.xlu0 %v446
    %v448 = vpop.xlane.xlu0 %447
    %v449 = vsel %vm271, %v74, 0.0
    %450 = vadd.xlane.f32.xlu0 %v449
    %v451 = vpop.xlane.xlu0 %450
    %v452 = vsel %vm271, %v75, 0.0
    %453 = vadd.xlane.f32.xlu0 %v452
    %v454 = vpop.xlane.xlu0 %453
    %v455 = vsel %vm271, %v76, 0.0
    %456 = vadd.xlane.f32.xlu0 %v455
    %v457 = vpop.xlane.xlu0 %456
    %v458 = vsel %vm271, %v77, 0.0
    %459 = vadd.xlane.f32.xlu0 %v458
    %v460 = vpop.xlane.xlu0 %459
    %v461 = vsel %vm271, %v78, 0.0
    %462 = vadd.xlane.f32.xlu0 %v461
    %v463 = vpop.xlane.xlu0 %462
    %v464 = vsel %vm271, %v79, 0.0
    %465 = vadd.xlane.f32.xlu0 %v464
    %v466 = vpop.xlane.xlu0 %465
    %v467 = vsel %vm271, %v80, 0.0
    %468 = vadd.xlane.f32.xlu0 %v467
    %v469 = vpop.xlane.xlu0 %468
    %v470 = vsel %vm271, %v81, 0.0
    %471 = vadd.xlane.f32.xlu0 %v470
    %v472 = vpop.xlane.xlu0 %471
    %v473 = vsel %vm271, %v82, 0.0
    %474 = vadd.xlane.f32.xlu0 %v473
    %v475 = vpop.xlane.xlu0 %474
    %v476 = vsel %vm271, %v83, 0.0
    %477 = vadd.xlane.f32.xlu0 %v476
    %v478 = vpop.xlane.xlu0 %477
    %v479 = vsel %vm271, %v84, 0.0
    %480 = vadd.xlane.f32.xlu0 %v479
    %v481 = vpop.xlane.xlu0 %480
    %v482 = vsel %vm271, %v85, 0.0
    %483 = vadd.xlane.f32.xlu0 %v482
    %v484 = vpop.xlane.xlu0 %483
    %v485 = vsel %vm271, %v86, 0.0
    %486 = vadd.xlane.f32.xlu0 %v485
    %v487 = vpop.xlane.xlu0 %486
    %v488 = vsel %vm271, %v87, 0.0
    %489 = vadd.xlane.f32.xlu0 %v488
    %v490 = vpop.xlane.xlu0 %489
    %v491 = vsel %vm271, %v88, 0.0
    %492 = vadd.xlane.f32.xlu0 %v491
    %v493 = vpop.xlane.xlu0 %492
    %v494 = vsel %vm271, %v89, 0.0
    %495 = vadd.xlane.f32.xlu0 %v494
    %v496 = vpop.xlane.xlu0 %495
    %v497 = vsel %vm271, %v90, 0.0
    %498 = vadd.xlane.f32.xlu0 %v497
    %v499 = vpop.xlane.xlu0 %498
    %v500 = vsel %vm271, %v91, 0.0
    %501 = vadd.xlane.f32.xlu0 %v500
    %v502 = vpop.xlane.xlu0 %501
    %v503 = vsel %vm271, %v92, 0.0
    %504 = vadd.xlane.f32.xlu0 %v503
    %v505 = vpop.xlane.xlu0 %504
    %v506 = vsel %vm271, %v93, 0.0
    %507 = vadd.xlane.f32.xlu0 %v506
    %v508 = vpop.xlane.xlu0 %507
    %v509 = vsel %vm271, %v94, 0.0
    %510 = vadd.xlane.f32.xlu0 %v509
    %v511 = vpop.xlane.xlu0 %510
    %v512 = vsel %vm271, %v95, 0.0
    %513 = vadd.xlane.f32.xlu0 %v512
    %v514 = vpop.xlane.xlu0 %513
    %v515 = vsel %vm271, %v96, 0.0
    %516 = vadd.xlane.f32.xlu0 %v515
    %v517 = vpop.xlane.xlu0 %516
    %v518 = vsel %vm271, %v97, 0.0
    %519 = vadd.xlane.f32.xlu0 %v518
    %v520 = vpop.xlane.xlu0 %519
    %v521 = vsel %vm271, %v98, 0.0
    %522 = vadd.xlane.f32.xlu0 %v521
    %v523 = vpop.xlane.xlu0 %522
    %v524 = vsel %vm271, %v99, 0.0
    %525 = vadd.xlane.f32.xlu0 %v524
    %v526 = vpop.xlane.xlu0 %525
    %v527 = vsel %vm271, %v100, 0.0
    %528 = vadd.xlane.f32.xlu0 %v527
    %v529 = vpop.xlane.xlu0 %528
    %v530 = vsel %vm271, %v101, 0.0
    %531 = vadd.xlane.f32.xlu0 %v530
    %v532 = vpop.xlane.xlu0 %531
    %v533 = vsel %vm271, %v102, 0.0
    %534 = vadd.xlane.f32.xlu0 %v533
    %v535 = vpop.xlane.xlu0 %534
    %v536 = vsel %vm271, %v103, 0.0
    %537 = vadd.xlane.f32.xlu0 %v536
    %v538 = vpop.xlane.xlu0 %537
    %v539 = vsel %vm271, %v104, 0.0
    %540 = vadd.xlane.f32.xlu0 %v539
    %v541 = vpop.xlane.xlu0 %540
    %v542 = vsel %vm271, %v105, 0.0
    %543 = vadd.xlane.f32.xlu0 %v542
    %v544 = vpop.xlane.xlu0 %543
    %v545 = vsel %vm271, %v106, 0.0
    %546 = vadd.xlane.f32.xlu0 %v545
    %v547 = vpop.xlane.xlu0 %546
    %v548 = vsel %vm271, %v107, 0.0
    %549 = vadd.xlane.f32.xlu0 %v548
    %v550 = vpop.xlane.xlu0 %549
    %v551 = vsel %vm271, %v108, 0.0
    %552 = vadd.xlane.f32.xlu0 %v551
    %v553 = vpop.xlane.xlu0 %552
    %v554 = vsel %vm271, %v109, 0.0
    %555 = vadd.xlane.f32.xlu0 %v554
    %v556 = vpop.xlane.xlu0 %555
    %v557 = vsel %vm271, %v110, 0.0
    %558 = vadd.xlane.f32.xlu0 %v557
    %v559 = vpop.xlane.xlu0 %558
    %v560 = vsel %vm271, %v111, 0.0
    %561 = vadd.xlane.f32.xlu0 %v560
    %v562 = vpop.xlane.xlu0 %561
    %v563 = vsel %vm271, %v112, 0.0
    %564 = vadd.xlane.f32.xlu0 %v563
    %v565 = vpop.xlane.xlu0 %564
    %v566 = vsel %vm271, %v113, 0.0
    %567 = vadd.xlane.f32.xlu0 %v566
    %v568 = vpop.xlane.xlu0 %567
    %v569 = vsel %vm271, %v114, 0.0
    %570 = vadd.xlane.f32.xlu0 %v569
    %v571 = vpop.xlane.xlu0 %570
    %v572 = vsel %vm271, %v115, 0.0
    %573 = vadd.xlane.f32.xlu0 %v572
    %v574 = vpop.xlane.xlu0 %573
    %v575 = vsel %vm271, %v116, 0.0
    %576 = vadd.xlane.f32.xlu0 %v575
    %v577 = vpop.xlane.xlu0 %576
    %v578 = vsel %vm271, %v117, 0.0
    %579 = vadd.xlane.f32.xlu0 %v578
    %v580 = vpop.xlane.xlu0 %579
    %v581 = vsel %vm271, %v118, 0.0
    %582 = vadd.xlane.f32.xlu0 %v581
    %v583 = vpop.xlane.xlu0 %582
    %v584 = vsel %vm271, %v119, 0.0
    %585 = vadd.xlane.f32.xlu0 %v584
    %v586 = vpop.xlane.xlu0 %585
    %v587 = vsel %vm271, %v120, 0.0
    %588 = vadd.xlane.f32.xlu0 %v587
    %v589 = vpop.xlane.xlu0 %588
    %v590 = vsel %vm271, %v121, 0.0
    %591 = vadd.xlane.f32.xlu0 %v590
    %v592 = vpop.xlane.xlu0 %591
    %v593 = vsel %vm271, %v122, 0.0
    %594 = vadd.xlane.f32.xlu0 %v593
    %v595 = vpop.xlane.xlu0 %594
    %v596 = vsel %vm271, %v123, 0.0
    %597 = vadd.xlane.f32.xlu0 %v596
    %v598 = vpop.xlane.xlu0 %597
    %v599 = vsel %vm271, %v124, 0.0
    %600 = vadd.xlane.f32.xlu0 %v599
    %v601 = vpop.xlane.xlu0 %600
    %v602 = vsel %vm271, %v125, 0.0
    %603 = vadd.xlane.f32.xlu0 %v602
    %v604 = vpop.xlane.xlu0 %603
    %v605 = vsel %vm271, %v126, 0.0
    %606 = vadd.xlane.f32.xlu0 %v605
    %v607 = vpop.xlane.xlu0 %606
    %v608 = vsel %vm271, %v127, 0.0
    %609 = vadd.xlane.f32.xlu0 %v608
    %v610 = vpop.xlane.xlu0 %609
    %v611 = vsel %vm271, %v128, 0.0
    %612 = vadd.xlane.f32.xlu0 %v611
    %v613 = vpop.xlane.xlu0 %612
    %v614 = vsel %vm271, %v129, 0.0
    %615 = vadd.xlane.f32.xlu0 %v614
    %v616 = vpop.xlane.xlu0 %615
    %v617 = vsel %vm271, %v130, 0.0
    %618 = vadd.xlane.f32.xlu0 %v617
    %v619 = vpop.xlane.xlu0 %618
    %v620 = vsel %vm271, %v131, 0.0
    %621 = vadd.xlane.f32.xlu0 %v620
    %v622 = vpop.xlane.xlu0 %621
    %v623 = vsel %vm271, %v132, 0.0
    %624 = vadd.xlane.f32.xlu0 %v623
    %v625 = vpop.xlane.xlu0 %624
    %v626 = vsel %vm271, %v133, 0.0
    %627 = vadd.xlane.f32.xlu0 %v626
    %v628 = vpop.xlane.xlu0 %627
    %v629 = vsel %vm271, %v134, 0.0
    %630 = vadd.xlane.f32.xlu0 %v629
    %v631 = vpop.xlane.xlu0 %630
    %v632 = vsel %vm271, %v135, 0.0
    %633 = vadd.xlane.f32.xlu0 %v632
    %v634 = vpop.xlane.xlu0 %633
    %v635 = vsel %vm271, %v136, 0.0
    %636 = vadd.xlane.f32.xlu0 %v635
    %v637 = vpop.xlane.xlu0 %636
    %v638 = vsel %vm271, %v137, 0.0
    %639 = vadd.xlane.f32.xlu0 %v638
    %v640 = vpop.xlane.xlu0 %639
    %v641 = vsel %vm271, %v138, 0.0
    %642 = vadd.xlane.f32.xlu0 %v641
    %v643 = vpop.xlane.xlu0 %642
    %v644 = vsel %vm271, %v139, 0.0
    %645 = vadd.xlane.f32.xlu0 %v644
    %v646 = vpop.xlane.xlu0 %645
    %v647 = vsel %vm271, %v140, 0.0
    %648 = vadd.xlane.f32.xlu0 %v647
    %v649 = vpop.xlane.xlu0 %648
    %v650 = vsel %vm271, %v141, 0.0
    %651 = vadd.xlane.f32.xlu0 %v650
    %v652 = vpop.xlane.xlu0 %651
    %v653 = vsel %vm271, %v142, 0.0
    %654 = vadd.xlane.f32.xlu0 %v653
    %v655 = vpop.xlane.xlu0 %654
    %v656 = vsel %vm271, %v143, 0.0
    %657 = vadd.xlane.f32.xlu0 %v656
    %v658 = vpop.xlane.xlu0 %657
    %v659 = vsel %vm271, %v144, 0.0
    %660 = vadd.xlane.f32.xlu0 %v659
    %v661 = vpop.xlane.xlu0 %660
    %v662 = vsel %vm271, %v145, 0.0
    %663 = vadd.xlane.f32.xlu0 %v662
    %v664 = vpop.xlane.xlu0 %663
    %v665 = vsel %vm271, %v146, 0.0
    %666 = vadd.xlane.f32.xlu0 %v665
    %v667 = vpop.xlane.xlu0 %666
    %v668 = vsel %vm271, %v147, 0.0
    %669 = vadd.xlane.f32.xlu0 %v668
    %v670 = vpop.xlane.xlu0 %669
    %v671 = vsel %vm271, %v148, 0.0
    %672 = vadd.xlane.f32.xlu0 %v671
    %v673 = vpop.xlane.xlu0 %672
    %v674 = vsel %vm271, %v149, 0.0
    %675 = vadd.xlane.f32.xlu0 %v674
    %v676 = vpop.xlane.xlu0 %675
    %v677 = vsel %vm271, %v150, 0.0
    %678 = vadd.xlane.f32.xlu0 %v677
    %v679 = vpop.xlane.xlu0 %678
    %v680 = vsel %vm271, %v151, 0.0
    %681 = vadd.xlane.f32.xlu0 %v680
    %v682 = vpop.xlane.xlu0 %681
    %v683 = vsel %vm271, %v152, 0.0
    %684 = vadd.xlane.f32.xlu0 %v683
    %v685 = vpop.xlane.xlu0 %684
    %v686 = vsel %vm271, %v153, 0.0
    %687 = vadd.xlane.f32.xlu0 %v686
    %v688 = vpop.xlane.xlu0 %687
    %v689 = vsel %vm271, %v154, 0.0
    %690 = vadd.xlane.f32.xlu0 %v689
    %v691 = vpop.xlane.xlu0 %690
    %v692 = vsel %vm271, %v155, 0.0
    %693 = vadd.xlane.f32.xlu0 %v692
    %v694 = vpop.xlane.xlu0 %693
    %v695 = vsel %vm271, %v156, 0.0
    %696 = vadd.xlane.f32.xlu0 %v695
    %v697 = vpop.xlane.xlu0 %696
    %v698 = vsel %vm271, %v157, 0.0
    %699 = vadd.xlane.f32.xlu0 %v698
    %v700 = vpop.xlane.xlu0 %699
    %v701 = vsel %vm271, %v158, 0.0
    %702 = vadd.xlane.f32.xlu0 %v701
    %v703 = vpop.xlane.xlu0 %702
    %v704 = vsel %vm271, %v159, 0.0
    %705 = vadd.xlane.f32.xlu0 %v704
    %v706 = vpop.xlane.xlu0 %705
    %v707 = vsel %vm271, %v160, 0.0
    %708 = vadd.xlane.f32.xlu0 %v707
    %v709 = vpop.xlane.xlu0 %708
    %v710 = vsel %vm271, %v161, 0.0
    %711 = vadd.xlane.f32.xlu0 %v710
    %v712 = vpop.xlane.xlu0 %711
    %v713 = vsel %vm271, %v162, 0.0
    %714 = vadd.xlane.f32.xlu0 %v713
    %v715 = vpop.xlane.xlu0 %714
    %v716 = vsel %vm271, %v163, 0.0
    %717 = vadd.xlane.f32.xlu0 %v716
    %v718 = vpop.xlane.xlu0 %717
    %v719 = vsel %vm271, %v164, 0.0
    %720 = vadd.xlane.f32.xlu0 %v719
    %v721 = vpop.xlane.xlu0 %720
    %v722 = vsel %vm271, %v165, 0.0
    %723 = vadd.xlane.f32.xlu0 %v722
    %v724 = vpop.xlane.xlu0 %723
    %v725 = vsel %vm271, %v166, 0.0
    %726 = vadd.xlane.f32.xlu0 %v725
    %v727 = vpop.xlane.xlu0 %726
    %v728 = vsel %vm271, %v167, 0.0
    %729 = vadd.xlane.f32.xlu0 %v728
    %v730 = vpop.xlane.xlu0 %729
    %v731 = vsel %vm271, %v168, 0.0
    %732 = vadd.xlane.f32.xlu0 %v731
    %v733 = vpop.xlane.xlu0 %732
    %v734 = vsel %vm271, %v169, 0.0
    %735 = vadd.xlane.f32.xlu0 %v734
    %v736 = vpop.xlane.xlu0 %735
    %v737 = vsel %vm271, %v170, 0.0
    %738 = vadd.xlane.f32.xlu0 %v737
    %v739 = vpop.xlane.xlu0 %738
    %v740 = vsel %vm271, %v171, 0.0
    %741 = vadd.xlane.f32.xlu0 %v740
    %v742 = vpop.xlane.xlu0 %741
    %v743 = vsel %vm271, %v172, 0.0
    %744 = vadd.xlane.f32.xlu0 %v743
    %v745 = vpop.xlane.xlu0 %744
    %v746 = vsel %vm271, %v173, 0.0
    %747 = vadd.xlane.f32.xlu0 %v746
    %v748 = vpop.xlane.xlu0 %747
    %v749 = vsel %vm271, %v174, 0.0
    %750 = vadd.xlane.f32.xlu0 %v749
    %v751 = vpop.xlane.xlu0 %750
    %v752 = vsel %vm271, %v175, 0.0
    %753 = vadd.xlane.f32.xlu0 %v752
    %v754 = vpop.xlane.xlu0 %753
    %v755 = vsel %vm271, %v176, 0.0
    %756 = vadd.xlane.f32.xlu0 %v755
    %v757 = vpop.xlane.xlu0 %756
    %v758 = vsel %vm271, %v177, 0.0
    %759 = vadd.xlane.f32.xlu0 %v758
    %v760 = vpop.xlane.xlu0 %759
    %v761 = vsel %vm271, %v178, 0.0
    %762 = vadd.xlane.f32.xlu0 %v761
    %v763 = vpop.xlane.xlu0 %762
    %v764 = vsel %vm271, %v179, 0.0
    %765 = vadd.xlane.f32.xlu0 %v764
    %v766 = vpop.xlane.xlu0 %765
    %v767 = vsel %vm271, %v180, 0.0
    %768 = vadd.xlane.f32.xlu0 %v767
    %v769 = vpop.xlane.xlu0 %768
    %v770 = vsel %vm271, %v181, 0.0
    %771 = vadd.xlane.f32.xlu0 %v770
    %v772 = vpop.xlane.xlu0 %771
    %v773 = vsel %vm271, %v182, 0.0
    %774 = vadd.xlane.f32.xlu0 %v773
    %v775 = vpop.xlane.xlu0 %774
    %v776 = vsel %vm271, %v183, 0.0
    %777 = vadd.xlane.f32.xlu0 %v776
    %v778 = vpop.xlane.xlu0 %777
    %v779 = vsel %vm271, %v184, 0.0
    %780 = vadd.xlane.f32.xlu0 %v779
    %v781 = vpop.xlane.xlu0 %780
    %v782 = vsel %vm271, %v185, 0.0
    %783 = vadd.xlane.f32.xlu0 %v782
    %v784 = vpop.xlane.xlu0 %783
    %v785 = vsel %vm271, %v186, 0.0
    %786 = vadd.xlane.f32.xlu0 %v785
    %v787 = vpop.xlane.xlu0 %786
    %v788 = vsel %vm271, %v187, 0.0
    %789 = vadd.xlane.f32.xlu0 %v788
    %v790 = vpop.xlane.xlu0 %789
    %v791 = vsel %vm271, %v188, 0.0
    %792 = vadd.xlane.f32.xlu0 %v791
    %v793 = vpop.xlane.xlu0 %792
    %v794 = vsel %vm271, %v189, 0.0
    %795 = vadd.xlane.f32.xlu0 %v794
    %v796 = vpop.xlane.xlu0 %795
    %v797 = vsel %vm271, %v190, 0.0
    %798 = vadd.xlane.f32.xlu0 %v797
    %v799 = vpop.xlane.xlu0 %798
    %v800 = vsel %vm271, %v191, 0.0
    %801 = vadd.xlane.f32.xlu0 %v800
    %v802 = vpop.xlane.xlu0 %801
    %v803 = vsel %vm271, %v192, 0.0
    %804 = vadd.xlane.f32.xlu0 %v803
    %v805 = vpop.xlane.xlu0 %804
    %v806 = vsel %vm271, %v193, 0.0
    %807 = vadd.xlane.f32.xlu0 %v806
    %v808 = vpop.xlane.xlu0 %807
    %v809 = vsel %vm271, %v194, 0.0
    %810 = vadd.xlane.f32.xlu0 %v809
    %v811 = vpop.xlane.xlu0 %810
    %v812 = vsel %vm271, %v195, 0.0
    %813 = vadd.xlane.f32.xlu0 %v812
    %v814 = vpop.xlane.xlu0 %813
    %v815 = vsel %vm271, %v196, 0.0
    %816 = vadd.xlane.f32.xlu0 %v815
    %v817 = vpop.xlane.xlu0 %816
    %v818 = vsel %vm271, %v197, 0.0
    %819 = vadd.xlane.f32.xlu0 %v818
    %v820 = vpop.xlane.xlu0 %819
    %v821 = vsel %vm271, %v198, 0.0
    %822 = vadd.xlane.f32.xlu0 %v821
    %v823 = vpop.xlane.xlu0 %822
    %v824 = vsel %vm271, %v199, 0.0
    %825 = vadd.xlane.f32.xlu0 %v824
    %v826 = vpop.xlane.xlu0 %825
    %v827 = vsel %vm271, %v200, 0.0
    %828 = vadd.xlane.f32.xlu0 %v827
    %v829 = vpop.xlane.xlu0 %828
    %v830 = vsel %vm271, %v201, 0.0
    %831 = vadd.xlane.f32.xlu0 %v830
    %v832 = vpop.xlane.xlu0 %831
    %v833 = vsel %vm271, %v202, 0.0
    %834 = vadd.xlane.f32.xlu0 %v833
    %v835 = vpop.xlane.xlu0 %834
    %v836 = vsel %vm271, %v203, 0.0
    %837 = vadd.xlane.f32.xlu0 %v836
    %v838 = vpop.xlane.xlu0 %837
    %v839 = vsel %vm271, %v204, 0.0
    %840 = vadd.xlane.f32.xlu0 %v839
    %v841 = vpop.xlane.xlu0 %840
    %v842 = vsel %vm271, %v205, 0.0
    %843 = vadd.xlane.f32.xlu0 %v842
    %v844 = vpop.xlane.xlu0 %843
    %v845 = vsel %vm271, %v206, 0.0
    %846 = vadd.xlane.f32.xlu0 %v845
    %v847 = vpop.xlane.xlu0 %846
    %v848 = vsel %vm271, %v207, 0.0
    %849 = vadd.xlane.f32.xlu0 %v848
    %v850 = vpop.xlane.xlu0 %849
    %v851 = vsel %vm271, %v208, 0.0
    %852 = vadd.xlane.f32.xlu0 %v851
    %v853 = vpop.xlane.xlu0 %852
    %v854 = vsel %vm271, %v209, 0.0
    %855 = vadd.xlane.f32.xlu0 %v854
    %v856 = vpop.xlane.xlu0 %855
    %v857 = vsel %vm271, %v210, 0.0
    %858 = vadd.xlane.f32.xlu0 %v857
    %v859 = vpop.xlane.xlu0 %858
    %v860 = vsel %vm271, %v211, 0.0
    %861 = vadd.xlane.f32.xlu0 %v860
    %v862 = vpop.xlane.xlu0 %861
    %v863 = vsel %vm271, %v212, 0.0
    %864 = vadd.xlane.f32.xlu0 %v863
    %v865 = vpop.xlane.xlu0 %864
    %v866 = vsel %vm271, %v213, 0.0
    %867 = vadd.xlane.f32.xlu0 %v866
    %v868 = vpop.xlane.xlu0 %867
    %v869 = vsel %vm271, %v214, 0.0
    %870 = vadd.xlane.f32.xlu0 %v869
    %v871 = vpop.xlane.xlu0 %870
    %v872 = vsel %vm271, %v215, 0.0
    %873 = vadd.xlane.f32.xlu0 %v872
    %v874 = vpop.xlane.xlu0 %873
    %v875 = vsel %vm271, %v216, 0.0
    %876 = vadd.xlane.f32.xlu0 %v875
    %v877 = vpop.xlane.xlu0 %876
    %v878 = vsel %vm271, %v217, 0.0
    %879 = vadd.xlane.f32.xlu0 %v878
    %v880 = vpop.xlane.xlu0 %879
    %v881 = vsel %vm271, %v218, 0.0
    %882 = vadd.xlane.f32.xlu0 %v881
    %v883 = vpop.xlane.xlu0 %882
    %v884 = vsel %vm271, %v219, 0.0
    %885 = vadd.xlane.f32.xlu0 %v884
    %v886 = vpop.xlane.xlu0 %885
    %v887 = vsel %vm271, %v220, 0.0
    %888 = vadd.xlane.f32.xlu0 %v887
    %v889 = vpop.xlane.xlu0 %888
    %v890 = vsel %vm271, %v221, 0.0
    %891 = vadd.xlane.f32.xlu0 %v890
    %v892 = vpop.xlane.xlu0 %891
    %v893 = vsel %vm271, %v222, 0.0
    %894 = vadd.xlane.f32.xlu0 %v893
    %v895 = vpop.xlane.xlu0 %894
    %v896 = vsel %vm271, %v223, 0.0
    %897 = vadd.xlane.f32.xlu0 %v896
    %v898 = vpop.xlane.xlu0 %897
    %v899 = vsel %vm271, %v224, 0.0
    %900 = vadd.xlane.f32.xlu0 %v899
    %v901 = vpop.xlane.xlu0 %900
    %v902 = vsel %vm271, %v225, 0.0
    %903 = vadd.xlane.f32.xlu0 %v902
    %v904 = vpop.xlane.xlu0 %903
    %v905 = vsel %vm271, %v226, 0.0
    %906 = vadd.xlane.f32.xlu0 %v905
    %v907 = vpop.xlane.xlu0 %906
    %v908 = vsel %vm271, %v227, 0.0
    %909 = vadd.xlane.f32.xlu0 %v908
    %v910 = vpop.xlane.xlu0 %909
    %v911 = vsel %vm271, %v228, 0.0
    %912 = vadd.xlane.f32.xlu0 %v911
    %v913 = vpop.xlane.xlu0 %912
    %v914 = vsel %vm271, %v229, 0.0
    %915 = vadd.xlane.f32.xlu0 %v914
    %v916 = vpop.xlane.xlu0 %915
    %v917 = vsel %vm271, %v230, 0.0
    %918 = vadd.xlane.f32.xlu0 %v917
    %v919 = vpop.xlane.xlu0 %918
    %v920 = vsel %vm271, %v231, 0.0
    %921 = vadd.xlane.f32.xlu0 %v920
    %v922 = vpop.xlane.xlu0 %921
    %v923 = vsel %vm271, %v232, 0.0
    %924 = vadd.xlane.f32.xlu0 %v923
    %v925 = vpop.xlane.xlu0 %924
    %v926 = vsel %vm271, %v233, 0.0
    %927 = vadd.xlane.f32.xlu0 %v926
    %v928 = vpop.xlane.xlu0 %927
    %v929 = vsel %vm271, %v234, 0.0
    %930 = vadd.xlane.f32.xlu0 %v929
    %v931 = vpop.xlane.xlu0 %930
    %v932 = vsel %vm271, %v235, 0.0
    %933 = vadd.xlane.f32.xlu0 %v932
    %v934 = vpop.xlane.xlu0 %933
    %v935 = vsel %vm271, %v236, 0.0
    %936 = vadd.xlane.f32.xlu0 %v935
    %v937 = vpop.xlane.xlu0 %936
    %v938 = vsel %vm271, %v237, 0.0
    %939 = vadd.xlane.f32.xlu0 %v938
    %v940 = vpop.xlane.xlu0 %939
    %v941 = vsel %vm271, %v238, 0.0
    %942 = vadd.xlane.f32.xlu0 %v941
    %v943 = vpop.xlane.xlu0 %942
    %v944 = vsel %vm271, %v239, 0.0
    %945 = vadd.xlane.f32.xlu0 %v944
    %v946 = vpop.xlane.xlu0 %945
    %v947 = vsel %vm271, %v240, 0.0
    %948 = vadd.xlane.f32.xlu0 %v947
    %v949 = vpop.xlane.xlu0 %948
    %v950 = vsel %vm271, %v241, 0.0
    %951 = vadd.xlane.f32.xlu0 %v950
    %v952 = vpop.xlane.xlu0 %951
    %v953 = vsel %vm271, %v242, 0.0
    %954 = vadd.xlane.f32.xlu0 %v953
    %v955 = vpop.xlane.xlu0 %954
    %v956 = vsel %vm271, %v243, 0.0
    %957 = vadd.xlane.f32.xlu0 %v956
    %v958 = vpop.xlane.xlu0 %957
    %v959 = vsel %vm271, %v244, 0.0
    %960 = vadd.xlane.f32.xlu0 %v959
    %v961 = vpop.xlane.xlu0 %960
    %v962 = vsel %vm271, %v245, 0.0
    %963 = vadd.xlane.f32.xlu0 %v962
    %v964 = vpop.xlane.xlu0 %963
    %v965 = vsel %vm271, %v246, 0.0
    %966 = vadd.xlane.f32.xlu0 %v965
    %v967 = vpop.xlane.xlu0 %966
    %v968 = vsel %vm271, %v247, 0.0
    %969 = vadd.xlane.f32.xlu0 %v968
    %v970 = vpop.xlane.xlu0 %969
    %v971 = vsel %vm271, %v248, 0.0
    %972 = vadd.xlane.f32.xlu0 %v971
    %v973 = vpop.xlane.xlu0 %972
    %v974 = vsel %vm271, %v249, 0.0
    %975 = vadd.xlane.f32.xlu0 %v974
    %v976 = vpop.xlane.xlu0 %975
    %v977 = vsel %vm271, %v250, 0.0
    %978 = vadd.xlane.f32.xlu0 %v977
    %v979 = vpop.xlane.xlu0 %978
    %v980 = vsel %vm271, %v251, 0.0
    %981 = vadd.xlane.f32.xlu0 %v980
    %v982 = vpop.xlane.xlu0 %981
    %v983 = vsel %vm271, %v252, 0.0
    %984 = vadd.xlane.f32.xlu0 %v983
    %v985 = vpop.xlane.xlu0 %984
    %v986 = vsel %vm271, %v253, 0.0
    %987 = vadd.xlane.f32.xlu0 %v986
    %v988 = vpop.xlane.xlu0 %987
    %v989 = vsel %vm271, %v254, 0.0
    %990 = vadd.xlane.f32.xlu0 %v989
    %v991 = vpop.xlane.xlu0 %990
    %v992 = vsel %vm271, %v255, 0.0
    %993 = vadd.xlane.f32.xlu0 %v992
    %v994 = vpop.xlane.xlu0 %993
    %v995 = vsel %vm271, %v256, 0.0
    %996 = vadd.xlane.f32.xlu0 %v995
    %v997 = vpop.xlane.xlu0 %996
    %v998 = vsel %vm271, %v257, 0.0
    %999 = vadd.xlane.f32.xlu0 %v998
    %v1000 = vpop.xlane.xlu0 %999
    %v1001 = vsel %vm271, %v258, 0.0
    %1002 = vadd.xlane.f32.xlu0 %v1001
    %v1003 = vpop.xlane.xlu0 %1002
    %v1004 = vsel %vm271, %v259, 0.0
    %1005 = vadd.xlane.f32.xlu0 %v1004
    %v1006 = vpop.xlane.xlu0 %1005
    %v1007 = vsel %vm271, %v260, 0.0
    %1008 = vadd.xlane.f32.xlu0 %v1007
    %v1009 = vpop.xlane.xlu0 %1008
    %v1010 = vsel %vm271, %v261, 0.0
    %1011 = vadd.xlane.f32.xlu0 %v1010
    %v1012 = vpop.xlane.xlu0 %1011
    %v1013 = vsel %vm271, %v262, 0.0
    %1014 = vadd.xlane.f32.xlu0 %v1013
    %v1015 = vpop.xlane.xlu0 %1014
    %v1016 = vsel %vm271, %v263, 0.0
    %1017 = vadd.xlane.f32.xlu0 %v1016
    %v1018 = vpop.xlane.xlu0 %1017
    %v1019 = vsel %vm271, %v264, 0.0
    %1020 = vadd.xlane.f32.xlu0 %v1019
    %v1021 = vpop.xlane.xlu0 %1020
    %v1022 = vsel %vm271, %v265, 0.0
    %1023 = vadd.xlane.f32.xlu0 %v1022
    %v1024 = vpop.xlane.xlu0 %1023
    %v1025 = vsel %vm271, %v266, 0.0
    %1026 = vadd.xlane.f32.xlu0 %v1025
    %v1027 = vpop.xlane.xlu0 %1026
    %v1028 = vsel %vm271, %v267, 0.0
    %1029 = vadd.xlane.f32.xlu0 %v1028
    %v1030 = vpop.xlane.xlu0 %1029
    %v1031 = vsel %vm271, %v268, 0.0
    %1032 = vadd.xlane.f32.xlu0 %v1031
    %v1033 = vpop.xlane.xlu0 %1032
    %v1034 = vsel %vm271, %v269, 0.0
    %1035 = vadd.xlane.f32.xlu0 %v1034
    %v1036 = vpop.xlane.xlu0 %1035
    %v1037 = vsel %vm271, %v270, 0.0
    %1038 = vadd.xlane.f32.xlu0 %v1037
    %v1039 = vpop.xlane.xlu0 %1038
    %v1040 = vrcp.pop 16.0
    %v1041 = vmul.f32 %v274, %v1040
    %v1042 = vmul.f32 %v277, %v1040
    %v1043 = vmul.f32 %v280, %v1040
    %v1044 = vmul.f32 %v283, %v1040
    %v1045 = vmul.f32 %v286, %v1040
    %v1046 = vmul.f32 %v289, %v1040
    %v1047 = vmul.f32 %v292, %v1040
    %v1048 = vmul.f32 %v295, %v1040
    %v1049 = vmul.f32 %v298, %v1040
    %v1050 = vmul.f32 %v301, %v1040
    %v1051 = vmul.f32 %v304, %v1040
    %v1052 = vmul.f32 %v307, %v1040
    %v1053 = vmul.f32 %v310, %v1040
    %v1054 = vmul.f32 %v313, %v1040
    %v1055 = vmul.f32 %v316, %v1040
    %v1056 = vmul.f32 %v319, %v1040
    %v1057 = vmul.f32 %v322, %v1040
    %v1058 = vmul.f32 %v325, %v1040
    %v1059 = vmul.f32 %v328, %v1040
    %v1060 = vmul.f32 %v331, %v1040
    %v1061 = vmul.f32 %v334, %v1040
    %v1062 = vmul.f32 %v337, %v1040
    %v1063 = vmul.f32 %v340, %v1040
    %v1064 = vmul.f32 %v343, %v1040
    %v1065 = vmul.f32 %v346, %v1040
    %v1066 = vmul.f32 %v349, %v1040
    %v1067 = vmul.f32 %v352, %v1040
    %v1068 = vmul.f32 %v355, %v1040
    %v1069 = vmul.f32 %v358, %v1040
    %v1070 = vmul.f32 %v361, %v1040
    %v1071 = vmul.f32 %v364, %v1040
    %v1072 = vmul.f32 %v367, %v1040
    %v1073 = vmul.f32 %v370, %v1040
    %v1074 = vmul.f32 %v373, %v1040
    %v1075 = vmul.f32 %v376, %v1040
    %v1076 = vmul.f32 %v379, %v1040
    %v1077 = vmul.f32 %v382, %v1040
    %v1078 = vmul.f32 %v385, %v1040
    %v1079 = vmul.f32 %v388, %v1040
    %v1080 = vmul.f32 %v391, %v1040
    %v1081 = vmul.f32 %v394, %v1040
    %v1082 = vmul.f32 %v397, %v1040
    %v1083 = vmul.f32 %v400, %v1040
    %v1084 = vmul.f32 %v403, %v1040
    %v1085 = vmul.f32 %v406, %v1040
    %v1086 = vmul.f32 %v409, %v1040
    %v1087 = vmul.f32 %v412, %v1040
    %v1088 = vmul.f32 %v415, %v1040
    %v1089 = vmul.f32 %v418, %v1040
    %v1090 = vmul.f32 %v421, %v1040
    %v1091 = vmul.f32 %v424, %v1040
    %v1092 = vmul.f32 %v427, %v1040
    %v1093 = vmul.f32 %v430, %v1040
    %v1094 = vmul.f32 %v433, %v1040
    %v1095 = vmul.f32 %v436, %v1040
    %v1096 = vmul.f32 %v439, %v1040
    %v1097 = vmul.f32 %v442, %v1040
    %v1098 = vmul.f32 %v445, %v1040
    %v1099 = vmul.f32 %v448, %v1040
    %v1100 = vmul.f32 %v451, %v1040
    %v1101 = vmul.f32 %v454, %v1040
    %v1102 = vmul.f32 %v457, %v1040
    %v1103 = vmul.f32 %v460, %v1040
    %v1104 = vmul.f32 %v463, %v1040
    %v1105 = vmul.f32 %v466, %v1040
    %v1106 = vmul.f32 %v469, %v1040
    %v1107 = vmul.f32 %v472, %v1040
    %v1108 = vmul.f32 %v475, %v1040
    %v1109 = vmul.f32 %v478, %v1040
    %v1110 = vmul.f32 %v481, %v1040
    %v1111 = vmul.f32 %v484, %v1040
    %v1112 = vmul.f32 %v487, %v1040
    %v1113 = vmul.f32 %v490, %v1040
    %v1114 = vmul.f32 %v493, %v1040
    %v1115 = vmul.f32 %v496, %v1040
    %v1116 = vmul.f32 %v499, %v1040
    %v1117 = vmul.f32 %v502, %v1040
    %v1118 = vmul.f32 %v505, %v1040
    %v1119 = vmul.f32 %v508, %v1040
    %v1120 = vmul.f32 %v511, %v1040
    %v1121 = vmul.f32 %v514, %v1040
    %v1122 = vmul.f32 %v517, %v1040
    %v1123 = vmul.f32 %v520, %v1040
    %v1124 = vmul.f32 %v523, %v1040
    %v1125 = vmul.f32 %v526, %v1040
    %v1126 = vmul.f32 %v529, %v1040
    %v1127 = vmul.f32 %v532, %v1040
    %v1128 = vmul.f32 %v535, %v1040
    %v1129 = vmul.f32 %v538, %v1040
    %v1130 = vmul.f32 %v541, %v1040
    %v1131 = vmul.f32 %v544, %v1040
    %v1132 = vmul.f32 %v547, %v1040
    %v1133 = vmul.f32 %v550, %v1040
    %v1134 = vmul.f32 %v553, %v1040
    %v1135 = vmul.f32 %v556, %v1040
    %v1136 = vmul.f32 %v559, %v1040
    %v1137 = vmul.f32 %v562, %v1040
    %v1138 = vmul.f32 %v565, %v1040
    %v1139 = vmul.f32 %v568, %v1040
    %v1140 = vmul.f32 %v571, %v1040
    %v1141 = vmul.f32 %v574, %v1040
    %v1142 = vmul.f32 %v577, %v1040
    %v1143 = vmul.f32 %v580, %v1040
    %v1144 = vmul.f32 %v583, %v1040
    %v1145 = vmul.f32 %v586, %v1040
    %v1146 = vmul.f32 %v589, %v1040
    %v1147 = vmul.f32 %v592, %v1040
    %v1148 = vmul.f32 %v595, %v1040
    %v1149 = vmul.f32 %v598, %v1040
    %v1150 = vmul.f32 %v601, %v1040
    %v1151 = vmul.f32 %v604, %v1040
    %v1152 = vmul.f32 %v607, %v1040
    %v1153 = vmul.f32 %v610, %v1040
    %v1154 = vmul.f32 %v613, %v1040
    %v1155 = vmul.f32 %v616, %v1040
    %v1156 = vmul.f32 %v619, %v1040
    %v1157 = vmul.f32 %v622, %v1040
    %v1158 = vmul.f32 %v625, %v1040
    %v1159 = vmul.f32 %v628, %v1040
    %v1160 = vmul.f32 %v631, %v1040
    %v1161 = vmul.f32 %v634, %v1040
    %v1162 = vmul.f32 %v637, %v1040
    %v1163 = vmul.f32 %v640, %v1040
    %v1164 = vmul.f32 %v643, %v1040
    %v1165 = vmul.f32 %v646, %v1040
    %v1166 = vmul.f32 %v649, %v1040
    %v1167 = vmul.f32 %v652, %v1040
    %v1168 = vmul.f32 %v655, %v1040
    %v1169 = vmul.f32 %v658, %v1040
    %v1170 = vmul.f32 %v661, %v1040
    %v1171 = vmul.f32 %v664, %v1040
    %v1172 = vmul.f32 %v667, %v1040
    %v1173 = vmul.f32 %v670, %v1040
    %v1174 = vmul.f32 %v673, %v1040
    %v1175 = vmul.f32 %v676, %v1040
    %v1176 = vmul.f32 %v679, %v1040
    %v1177 = vmul.f32 %v682, %v1040
    %v1178 = vmul.f32 %v685, %v1040
    %v1179 = vmul.f32 %v688, %v1040
    %v1180 = vmul.f32 %v691, %v1040
    %v1181 = vmul.f32 %v694, %v1040
    %v1182 = vmul.f32 %v697, %v1040
    %v1183 = vmul.f32 %v700, %v1040
    %v1184 = vmul.f32 %v703, %v1040
    %v1185 = vmul.f32 %v706, %v1040
    %v1186 = vmul.f32 %v709, %v1040
    %v1187 = vmul.f32 %v712, %v1040
    %v1188 = vmul.f32 %v715, %v1040
    %v1189 = vmul.f32 %v718, %v1040
    %v1190 = vmul.f32 %v721, %v1040
    %v1191 = vmul.f32 %v724, %v1040
    %v1192 = vmul.f32 %v727, %v1040
    %v1193 = vmul.f32 %v730, %v1040
    %v1194 = vmul.f32 %v733, %v1040
    %v1195 = vmul.f32 %v736, %v1040
    %v1196 = vmul.f32 %v739, %v1040
    %v1197 = vmul.f32 %v742, %v1040
    %v1198 = vmul.f32 %v745, %v1040
    %v1199 = vmul.f32 %v748, %v1040
    %v1200 = vmul.f32 %v751, %v1040
    %v1201 = vmul.f32 %v754, %v1040
    %v1202 = vmul.f32 %v757, %v1040
    %v1203 = vmul.f32 %v760, %v1040
    %v1204 = vmul.f32 %v763, %v1040
    %v1205 = vmul.f32 %v766, %v1040
    %v1206 = vmul.f32 %v769, %v1040
    %v1207 = vmul.f32 %v772, %v1040
    %v1208 = vmul.f32 %v775, %v1040
    %v1209 = vmul.f32 %v778, %v1040
    %v1210 = vmul.f32 %v781, %v1040
    %v1211 = vmul.f32 %v784, %v1040
    %v1212 = vmul.f32 %v787, %v1040
    %v1213 = vmul.f32 %v790, %v1040
    %v1214 = vmul.f32 %v793, %v1040
    %v1215 = vmul.f32 %v796, %v1040
    %v1216 = vmul.f32 %v799, %v1040
    %v1217 = vmul.f32 %v802, %v1040
    %v1218 = vmul.f32 %v805, %v1040
    %v1219 = vmul.f32 %v808, %v1040
    %v1220 = vmul.f32 %v811, %v1040
    %v1221 = vmul.f32 %v814, %v1040
    %v1222 = vmul.f32 %v817, %v1040
    %v1223 = vmul.f32 %v820, %v1040
    %v1224 = vmul.f32 %v823, %v1040
    %v1225 = vmul.f32 %v826, %v1040
    %v1226 = vmul.f32 %v829, %v1040
    %v1227 = vmul.f32 %v832, %v1040
    %v1228 = vmul.f32 %v835, %v1040
    %v1229 = vmul.f32 %v838, %v1040
    %v1230 = vmul.f32 %v841, %v1040
    %v1231 = vmul.f32 %v844, %v1040
    %v1232 = vmul.f32 %v847, %v1040
    %v1233 = vmul.f32 %v850, %v1040
    %v1234 = vmul.f32 %v853, %v1040
    %v1235 = vmul.f32 %v856, %v1040
    %v1236 = vmul.f32 %v859, %v1040
    %v1237 = vmul.f32 %v862, %v1040
    %v1238 = vmul.f32 %v865, %v1040
    %v1239 = vmul.f32 %v868, %v1040
    %v1240 = vmul.f32 %v871, %v1040
    %v1241 = vmul.f32 %v874, %v1040
    %v1242 = vmul.f32 %v877, %v1040
    %v1243 = vmul.f32 %v880, %v1040
    %v1244 = vmul.f32 %v883, %v1040
    %v1245 = vmul.f32 %v886, %v1040
    %v1246 = vmul.f32 %v889, %v1040
    %v1247 = vmul.f32 %v892, %v1040
    %v1248 = vmul.f32 %v895, %v1040
    %v1249 = vmul.f32 %v898, %v1040
    %v1250 = vmul.f32 %v901, %v1040
    %v1251 = vmul.f32 %v904, %v1040
    %v1252 = vmul.f32 %v907, %v1040
    %v1253 = vmul.f32 %v910, %v1040
    %v1254 = vmul.f32 %v913, %v1040
    %v1255 = vmul.f32 %v916, %v1040
    %v1256 = vmul.f32 %v919, %v1040
    %v1257 = vmul.f32 %v922, %v1040
    %v1258 = vmul.f32 %v925, %v1040
    %v1259 = vmul.f32 %v928, %v1040
    %v1260 = vmul.f32 %v931, %v1040
    %v1261 = vmul.f32 %v934, %v1040
    %v1262 = vmul.f32 %v937, %v1040
    %v1263 = vmul.f32 %v940, %v1040
    %v1264 = vmul.f32 %v943, %v1040
    %v1265 = vmul.f32 %v946, %v1040
    %v1266 = vmul.f32 %v949, %v1040
    %v1267 = vmul.f32 %v952, %v1040
    %v1268 = vmul.f32 %v955, %v1040
    %v1269 = vmul.f32 %v958, %v1040
    %v1270 = vmul.f32 %v961, %v1040
    %v1271 = vmul.f32 %v964, %v1040
    %v1272 = vmul.f32 %v967, %v1040
    %v1273 = vmul.f32 %v970, %v1040
    %v1274 = vmul.f32 %v973, %v1040
    %v1275 = vmul.f32 %v976, %v1040
    %v1276 = vmul.f32 %v979, %v1040
    %v1277 = vmul.f32 %v982, %v1040
    %v1278 = vmul.f32 %v985, %v1040
    %v1279 = vmul.f32 %v988, %v1040
    %v1280 = vmul.f32 %v991, %v1040
    %v1281 = vmul.f32 %v994, %v1040
    %v1282 = vmul.f32 %v997, %v1040
    %v1283 = vmul.f32 %v1000, %v1040
    %v1284 = vmul.f32 %v1003, %v1040
    %v1285 = vmul.f32 %v1006, %v1040
    %v1286 = vmul.f32 %v1009, %v1040
    %v1287 = vmul.f32 %v1012, %v1040
    %v1288 = vmul.f32 %v1015, %v1040
    %v1289 = vmul.f32 %v1018, %v1040
    %v1290 = vmul.f32 %v1021, %v1040
    %v1291 = vmul.f32 %v1024, %v1040
    %v1292 = vmul.f32 %v1027, %v1040
    %v1293 = vmul.f32 %v1030, %v1040
    %v1294 = vmul.f32 %v1033, %v1040
    %v1295 = vmul.f32 %v1036, %v1040
    %v1296 = vmul.f32 %v1039, %v1040
    %v1297 = vld [vmem:[%s1] sm:$0xff]
    %v1298 = vld [vmem:[%s1 + $0x8] sm:$0xff]
    %v1299 = vld [vmem:[%s1 + $0x10] sm:$0xff]
    %v1300 = vld [vmem:[%s1 + $0x18] sm:$0xff]
    %v1301 = vld [vmem:[%s1 + $0x20] sm:$0xff]
    %v1302 = vld [vmem:[%s1 + $0x28] sm:$0xff]
    %v1303 = vld [vmem:[%s1 + $0x30] sm:$0xff]
    %v1304 = vld [vmem:[%s1 + $0x38] sm:$0xff]
    %v1305 = vld [vmem:[%s1 + $0x40] sm:$0xff]
    %v1306 = vld [vmem:[%s1 + $0x48] sm:$0xff]
    %v1307 = vld [vmem:[%s1 + $0x50] sm:$0xff]
    %v1308 = vld [vmem:[%s1 + $0x58] sm:$0xff]
    %v1309 = vld [vmem:[%s1 + $0x60] sm:$0xff]
    %v1310 = vld [vmem:[%s1 + $0x68] sm:$0xff]
    %v1311 = vld [vmem:[%s1 + $0x70] sm:$0xff]
    %v1312 = vld [vmem:[%s1 + $0x78] sm:$0xff]
    %v1313 = vld [vmem:[%s1 + $0x80] sm:$0xff]
    %v1314 = vld [vmem:[%s1 + $0x88] sm:$0xff]
    %v1315 = vld [vmem:[%s1 + $0x90] sm:$0xff]
    %v1316 = vld [vmem:[%s1 + $0x98] sm:$0xff]
    %v1317 = vld [vmem:[%s1 + $0xa0] sm:$0xff]
    %v1318 = vld [vmem:[%s1 + $0xa8] sm:$0xff]
    %v1319 = vld [vmem:[%s1 + $0xb0] sm:$0xff]
    %v1320 = vld [vmem:[%s1 + $0xb8] sm:$0xff]
    %v1321 = vld [vmem:[%s1 + $0xc0] sm:$0xff]
    %v1322 = vld [vmem:[%s1 + $0xc8] sm:$0xff]
    %v1323 = vld [vmem:[%s1 + $0xd0] sm:$0xff]
    %v1324 = vld [vmem:[%s1 + $0xd8] sm:$0xff]
    %v1325 = vld [vmem:[%s1 + $0xe0] sm:$0xff]
    %v1326 = vld [vmem:[%s1 + $0xe8] sm:$0xff]
    %v1327 = vld [vmem:[%s1 + $0xf0] sm:$0xff]
    %v1328 = vld [vmem:[%s1 + $0xf8] sm:$0xff]
    %v1329 = vld [vmem:[%s1 + $0x100] sm:$0xff]
    %v1330 = vld [vmem:[%s1 + $0x108] sm:$0xff]
    %v1331 = vld [vmem:[%s1 + $0x110] sm:$0xff]
    %v1332 = vld [vmem:[%s1 + $0x118] sm:$0xff]
    %v1333 = vld [vmem:[%s1 + $0x120] sm:$0xff]
    %v1334 = vld [vmem:[%s1 + $0x128] sm:$0xff]
    %v1335 = vld [vmem:[%s1 + $0x130] sm:$0xff]
    %v1336 = vld [vmem:[%s1 + $0x138] sm:$0xff]
    %v1337 = vld [vmem:[%s1 + $0x140] sm:$0xff]
    %v1338 = vld [vmem:[%s1 + $0x148] sm:$0xff]
    %v1339 = vld [vmem:[%s1 + $0x150] sm:$0xff]
    %v1340 = vld [vmem:[%s1 + $0x158] sm:$0xff]
    %v1341 = vld [vmem:[%s1 + $0x160] sm:$0xff]
    %v1342 = vld [vmem:[%s1 + $0x168] sm:$0xff]
    %v1343 = vld [vmem:[%s1 + $0x170] sm:$0xff]
    %v1344 = vld [vmem:[%s1 + $0x178] sm:$0xff]
    %v1345 = vld [vmem:[%s1 + $0x180] sm:$0xff]
    %v1346 = vld [vmem:[%s1 + $0x188] sm:$0xff]
    %v1347 = vld [vmem:[%s1 + $0x190] sm:$0xff]
    %v1348 = vld [vmem:[%s1 + $0x198] sm:$0xff]
    %v1349 = vld [vmem:[%s1 + $0x1a0] sm:$0xff]
    %v1350 = vld [vmem:[%s1 + $0x1a8] sm:$0xff]
    %v1351 = vld [vmem:[%s1 + $0x1b0] sm:$0xff]
    %v1352 = vld [vmem:[%s1 + $0x1b8] sm:$0xff]
    %v1353 = vld [vmem:[%s1 + $0x1c0] sm:$0xff]
    %v1354 = vld [vmem:[%s1 + $0x1c8] sm:$0xff]
    %v1355 = vld [vmem:[%s1 + $0x1d0] sm:$0xff]
    %v1356 = vld [vmem:[%s1 + $0x1d8] sm:$0xff]
    %v1357 = vld [vmem:[%s1 + $0x1e0] sm:$0xff]
    %v1358 = vld [vmem:[%s1 + $0x1e8] sm:$0xff]
    %v1359 = vld [vmem:[%s1 + $0x1f0] sm:$0xff]
    %v1360 = vld [vmem:[%s1 + $0x1f8] sm:$0xff]
    %v1361 = vld [vmem:[%s1 + $0x200] sm:$0xff]
    %v1362 = vld [vmem:[%s1 + $0x208] sm:$0xff]
    %v1363 = vld [vmem:[%s1 + $0x210] sm:$0xff]
    %v1364 = vld [vmem:[%s1 + $0x218] sm:$0xff]
    %v1365 = vld [vmem:[%s1 + $0x220] sm:$0xff]
    %v1366 = vld [vmem:[%s1 + $0x228] sm:$0xff]
    %v1367 = vld [vmem:[%s1 + $0x230] sm:$0xff]
    %v1368 = vld [vmem:[%s1 + $0x238] sm:$0xff]
    %v1369 = vld [vmem:[%s1 + $0x240] sm:$0xff]
    %v1370 = vld [vmem:[%s1 + $0x248] sm:$0xff]
    %v1371 = vld [vmem:[%s1 + $0x250] sm:$0xff]
    %v1372 = vld [vmem:[%s1 + $0x258] sm:$0xff]
    %v1373 = vld [vmem:[%s1 + $0x260] sm:$0xff]
    %v1374 = vld [vmem:[%s1 + $0x268] sm:$0xff]
    %v1375 = vld [vmem:[%s1 + $0x270] sm:$0xff]
    %v1376 = vld [vmem:[%s1 + $0x278] sm:$0xff]
    %v1377 = vld [vmem:[%s1 + $0x280] sm:$0xff]
    %v1378 = vld [vmem:[%s1 + $0x288] sm:$0xff]
    %v1379 = vld [vmem:[%s1 + $0x290] sm:$0xff]
    %v1380 = vld [vmem:[%s1 + $0x298] sm:$0xff]
    %v1381 = vld [vmem:[%s1 + $0x2a0] sm:$0xff]
    %v1382 = vld [vmem:[%s1 + $0x2a8] sm:$0xff]
    %v1383 = vld [vmem:[%s1 + $0x2b0] sm:$0xff]
    %v1384 = vld [vmem:[%s1 + $0x2b8] sm:$0xff]
    %v1385 = vld [vmem:[%s1 + $0x2c0] sm:$0xff]
    %v1386 = vld [vmem:[%s1 + $0x2c8] sm:$0xff]
    %v1387 = vld [vmem:[%s1 + $0x2d0] sm:$0xff]
    %v1388 = vld [vmem:[%s1 + $0x2d8] sm:$0xff]
    %v1389 = vld [vmem:[%s1 + $0x2e0] sm:$0xff]
    %v1390 = vld [vmem:[%s1 + $0x2e8] sm:$0xff]
    %v1391 = vld [vmem:[%s1 + $0x2f0] sm:$0xff]
    %v1392 = vld [vmem:[%s1 + $0x2f8] sm:$0xff]
    %v1393 = vld [vmem:[%s2] sm:$0x7]
    %v1395 = vlaneseq
    %v1396 = vshrl.u32 %v1395, 7
    %v1397 = vsub.s32 0, %v1396
    %v1398 = vrot.slane %v1393, %v1397
    %v1399 = vlaneseq
    %v1400 = vshrl.u32 %v1399, 7
    %v1401 = vsub.s32 1, %v1400
    %v1402 = vrot.slane %v1393, %v1401
    %v1403 = vlaneseq
    %v1404 = vshrl.u32 %v1403, 7
    %v1405 = vsub.s32 2, %v1404
    %v1406 = vrot.slane %v1393, %v1405
    %v1666 = vlaneseq
    %v1667 = vand.u32 %v1666, 127
    %v1668 = vlaneseq
    %v1669 = vshrl.u32 %v1668, 7
    %v1670 = vsub.s32 %v1667, %v1669
    %v1671 = vrot.slane %v1041, %v1670
    %v1672 = vadd.s32 %v1667, 4294967288
    %v1673 = vlaneseq
    %v1674 = vshrl.u32 %v1673, 7
    %v1675 = vsub.s32 %v1672, %v1674
    %v1676 = vrot.slane %v1042, %v1675
    %vm1677 = vcmask 130112
    %v1678 = vsel %vm1677, %v1676, %v1671
    %v1679 = vadd.s32 %v1667, 4294967280
    %v1680 = vlaneseq
    %v1681 = vshrl.u32 %v1680, 7
    %v1682 = vsub.s32 %v1679, %v1681
    %v1683 = vrot.slane %v1043, %v1682
    %vm1684 = vcmask 195712
    %v1685 = vsel %vm1684, %v1683, %v1678
    %v1686 = vadd.s32 %v1667, 4294967272
    %v1687 = vlaneseq
    %v1688 = vshrl.u32 %v1687, 7
    %v1689 = vsub.s32 %v1686, %v1688
    %v1690 = vrot.slane %v1044, %v1689
    %vm1691 = vcmask 261312
    %v1692 = vsel %vm1691, %v1690, %v1685
    %v1693 = vadd.s32 %v1667, 4294967264
    %v1694 = vlaneseq
    %v1695 = vshrl.u32 %v1694, 7
    %v1696 = vsub.s32 %v1693, %v1695
    %v1697 = vrot.slane %v1045, %v1696
    %vm1698 = vcmask 326912
    %v1699 = vsel %vm1698, %v1697, %v1692
    %v1700 = vadd.s32 %v1667, 4294967256
    %v1701 = vlaneseq
    %v1702 = vshrl.u32 %v1701, 7
    %v1703 = vsub.s32 %v1700, %v1702
    %v1704 = vrot.slane %v1046, %v1703
    %vm1705 = vcmask 392512
    %v1706 = vsel %vm1705, %v1704, %v1699
    %v1707 = vadd.s32 %v1667, 4294967248
    %v1708 = vlaneseq
    %v1709 = vshrl.u32 %v1708, 7
    %v1710 = vsub.s32 %v1707, %v1709
    %v1711 = vrot.slane %v1047, %v1710
    %vm1712 = vcmask 458112
    %v1713 = vsel %vm1712, %v1711, %v1706
    %v1714 = vadd.s32 %v1667, 4294967240
    %v1715 = vlaneseq
    %v1716 = vshrl.u32 %v1715, 7
    %v1717 = vsub.s32 %v1714, %v1716
    %v1718 = vrot.slane %v1048, %v1717
    %vm1719 = vcmask 523712
    %v1720 = vsel %vm1719, %v1718, %v1713
    %v1721 = vadd.s32 %v1667, 4294967232
    %v1722 = vlaneseq
    %v1723 = vshrl.u32 %v1722, 7
    %v1724 = vsub.s32 %v1721, %v1723
    %v1725 = vrot.slane %v1049, %v1724
    %vm1726 = vcmask 589312
    %v1727 = vsel %vm1726, %v1725, %v1720
    %v1728 = vadd.s32 %v1667, 4294967224
    %v1729 = vlaneseq
    %v1730 = vshrl.u32 %v1729, 7
    %v1731 = vsub.s32 %v1728, %v1730
    %v1732 = vrot.slane %v1050, %v1731
    %vm1733 = vcmask 654912
    %v1734 = vsel %vm1733, %v1732, %v1727
    %v1735 = vadd.s32 %v1667, 4294967216
    %v1736 = vlaneseq
    %v1737 = vshrl.u32 %v1736, 7
    %v1738 = vsub.s32 %v1735, %v1737
    %v1739 = vrot.slane %v1051, %v1738
    %vm1740 = vcmask 720512
    %v1741 = vsel %vm1740, %v1739, %v1734
    %v1742 = vadd.s32 %v1667, 4294967208
    %v1743 = vlaneseq
    %v1744 = vshrl.u32 %v1743, 7
    %v1745 = vsub.s32 %v1742, %v1744
    %v1746 = vrot.slane %v1052, %v1745
    %vm1747 = vcmask 786112
    %v1748 = vsel %vm1747, %v1746, %v1741
    %v1749 = vadd.s32 %v1667, 4294967200
    %v1750 = vlaneseq
    %v1751 = vshrl.u32 %v1750, 7
    %v1752 = vsub.s32 %v1749, %v1751
    %v1753 = vrot.slane %v1053, %v1752
    %vm1754 = vcmask 851712
    %v1755 = vsel %vm1754, %v1753, %v1748
    %v1756 = vadd.s32 %v1667, 4294967192
    %v1757 = vlaneseq
    %v1758 = vshrl.u32 %v1757, 7
    %v1759 = vsub.s32 %v1756, %v1758
    %v1760 = vrot.slane %v1054, %v1759
    %vm1761 = vcmask 917312
    %v1762 = vsel %vm1761, %v1760, %v1755
    %v1763 = vadd.s32 %v1667, 4294967184
    %v1764 = vlaneseq
    %v1765 = vshrl.u32 %v1764, 7
    %v1766 = vsub.s32 %v1763, %v1765
    %v1767 = vrot.slane %v1055, %v1766
    %vm1768 = vcmask 982912
    %v1769 = vsel %vm1768, %v1767, %v1762
    %v1770 = vadd.s32 %v1667, 4294967176
    %v1771 = vlaneseq
    %v1772 = vshrl.u32 %v1771, 7
    %v1773 = vsub.s32 %v1770, %v1772
    %v1774 = vrot.slane %v1056, %v1773
    %vm1775 = vcmask 1048512
    %v1776 = vsel %vm1775, %v1774, %v1769
    %v1777 = vlaneseq
    %v1778 = vshrl.u32 %v1777, 7
    %v1779 = vsub.s32 %v1667, %v1778
    %v1780 = vrot.slane %v1057, %v1779
    %v1781 = vlaneseq
    %v1782 = vshrl.u32 %v1781, 7
    %v1783 = vsub.s32 %v1672, %v1782
    %v1784 = vrot.slane %v1058, %v1783
    %v1785 = vsel %vm1677, %v1784, %v1780
    %v1786 = vlaneseq
    %v1787 = vshrl.u32 %v1786, 7
    %v1788 = vsub.s32 %v1679, %v1787
    %v1789 = vrot.slane %v1059, %v1788
    %v1790 = vsel %vm1684, %v1789, %v1785
    %v1791 = vlaneseq
    %v1792 = vshrl.u32 %v1791, 7
    %v1793 = vsub.s32 %v1686, %v1792
    %v1794 = vrot.slane %v1060, %v1793
    %v1795 = vsel %vm1691, %v1794, %v1790
    %v1796 = vlaneseq
    %v1797 = vshrl.u32 %v1796, 7
    %v1798 = vsub.s32 %v1693, %v1797
    %v1799 = vrot.slane %v1061, %v1798
    %v1800 = vsel %vm1698, %v1799, %v1795
    %v1801 = vlaneseq
    %v1802 = vshrl.u32 %v1801, 7
    %v1803 = vsub.s32 %v1700, %v1802
    %v1804 = vrot.slane %v1062, %v1803
    %v1805 = vsel %vm1705, %v1804, %v1800
    %v1806 = vlaneseq
    %v1807 = vshrl.u32 %v1806, 7
    %v1808 = vsub.s32 %v1707, %v1807
    %v1809 = vrot.slane %v1063, %v1808
    %v1810 = vsel %vm1712, %v1809, %v1805
    %v1811 = vlaneseq
    %v1812 = vshrl.u32 %v1811, 7
    %v1813 = vsub.s32 %v1714, %v1812
    %v1814 = vrot.slane %v1064, %v1813
    %v1815 = vsel %vm1719, %v1814, %v1810
    %v1816 = vlaneseq
    %v1817 = vshrl.u32 %v1816, 7
    %v1818 = vsub.s32 %v1721, %v1817
    %v1819 = vrot.slane %v1065, %v1818
    %v1820 = vsel %vm1726, %v1819, %v1815
    %v1821 = vlaneseq
    %v1822 = vshrl.u32 %v1821, 7
    %v1823 = vsub.s32 %v1728, %v1822
    %v1824 = vrot.slane %v1066, %v1823
    %v1825 = vsel %vm1733, %v1824, %v1820
    %v1826 = vlaneseq
    %v1827 = vshrl.u32 %v1826, 7
    %v1828 = vsub.s32 %v1735, %v1827
    %v1829 = vrot.slane %v1067, %v1828
    %v1830 = vsel %vm1740, %v1829, %v1825
    %v1831 = vlaneseq
    %v1832 = vshrl.u32 %v1831, 7
    %v1833 = vsub.s32 %v1742, %v1832
    %v1834 = vrot.slane %v1068, %v1833
    %v1835 = vsel %vm1747, %v1834, %v1830
    %v1836 = vlaneseq
    %v1837 = vshrl.u32 %v1836, 7
    %v1838 = vsub.s32 %v1749, %v1837
    %v1839 = vrot.slane %v1069, %v1838
    %v1840 = vsel %vm1754, %v1839, %v1835
    %v1841 = vlaneseq
    %v1842 = vshrl.u32 %v1841, 7
    %v1843 = vsub.s32 %v1756, %v1842
    %v1844 = vrot.slane %v1070, %v1843
    %v1845 = vsel %vm1761, %v1844, %v1840
    %v1846 = vlaneseq
    %v1847 = vshrl.u32 %v1846, 7
    %v1848 = vsub.s32 %v1763, %v1847
    %v1849 = vrot.slane %v1071, %v1848
    %v1850 = vsel %vm1768, %v1849, %v1845
    %v1851 = vlaneseq
    %v1852 = vshrl.u32 %v1851, 7
    %v1853 = vsub.s32 %v1770, %v1852
    %v1854 = vrot.slane %v1072, %v1853
    %v1855 = vsel %vm1775, %v1854, %v1850
    %v1856 = vlaneseq
    %v1857 = vshrl.u32 %v1856, 7
    %v1858 = vsub.s32 %v1667, %v1857
    %v1859 = vrot.slane %v1073, %v1858
    %v1860 = vlaneseq
    %v1861 = vshrl.u32 %v1860, 7
    %v1862 = vsub.s32 %v1672, %v1861
    %v1863 = vrot.slane %v1074, %v1862
    %v1864 = vsel %vm1677, %v1863, %v1859
    %v1865 = vlaneseq
    %v1866 = vshrl.u32 %v1865, 7
    %v1867 = vsub.s32 %v1679, %v1866
    %v1868 = vrot.slane %v1075, %v1867
    %v1869 = vsel %vm1684, %v1868, %v1864
    %v1870 = vlaneseq
    %v1871 = vshrl.u32 %v1870, 7
    %v1872 = vsub.s32 %v1686, %v1871
    %v1873 = vrot.slane %v1076, %v1872
    %v1874 = vsel %vm1691, %v1873, %v1869
    %v1875 = vlaneseq
    %v1876 = vshrl.u32 %v1875, 7
    %v1877 = vsub.s32 %v1693, %v1876
    %v1878 = vrot.slane %v1077, %v1877
    %v1879 = vsel %vm1698, %v1878, %v1874
    %v1880 = vlaneseq
    %v1881 = vshrl.u32 %v1880, 7
    %v1882 = vsub.s32 %v1700, %v1881
    %v1883 = vrot.slane %v1078, %v1882
    %v1884 = vsel %vm1705, %v1883, %v1879
    %v1885 = vlaneseq
    %v1886 = vshrl.u32 %v1885, 7
    %v1887 = vsub.s32 %v1707, %v1886
    %v1888 = vrot.slane %v1079, %v1887
    %v1889 = vsel %vm1712, %v1888, %v1884
    %v1890 = vlaneseq
    %v1891 = vshrl.u32 %v1890, 7
    %v1892 = vsub.s32 %v1714, %v1891
    %v1893 = vrot.slane %v1080, %v1892
    %v1894 = vsel %vm1719, %v1893, %v1889
    %v1895 = vlaneseq
    %v1896 = vshrl.u32 %v1895, 7
    %v1897 = vsub.s32 %v1721, %v1896
    %v1898 = vrot.slane %v1081, %v1897
    %v1899 = vsel %vm1726, %v1898, %v1894
    %v1900 = vlaneseq
    %v1901 = vshrl.u32 %v1900, 7
    %v1902 = vsub.s32 %v1728, %v1901
    %v1903 = vrot.slane %v1082, %v1902
    %v1904 = vsel %vm1733, %v1903, %v1899
    %v1905 = vlaneseq
    %v1906 = vshrl.u32 %v1905, 7
    %v1907 = vsub.s32 %v1735, %v1906
    %v1908 = vrot.slane %v1083, %v1907
    %v1909 = vsel %vm1740, %v1908, %v1904
    %v1910 = vlaneseq
    %v1911 = vshrl.u32 %v1910, 7
    %v1912 = vsub.s32 %v1742, %v1911
    %v1913 = vrot.slane %v1084, %v1912
    %v1914 = vsel %vm1747, %v1913, %v1909
    %v1915 = vlaneseq
    %v1916 = vshrl.u32 %v1915, 7
    %v1917 = vsub.s32 %v1749, %v1916
    %v1918 = vrot.slane %v1085, %v1917
    %v1919 = vsel %vm1754, %v1918, %v1914
    %v1920 = vlaneseq
    %v1921 = vshrl.u32 %v1920, 7
    %v1922 = vsub.s32 %v1756, %v1921
    %v1923 = vrot.slane %v1086, %v1922
    %v1924 = vsel %vm1761, %v1923, %v1919
    %v1925 = vlaneseq
    %v1926 = vshrl.u32 %v1925, 7
    %v1927 = vsub.s32 %v1763, %v1926
    %v1928 = vrot.slane %v1087, %v1927
    %v1929 = vsel %vm1768, %v1928, %v1924
    %v1930 = vlaneseq
    %v1931 = vshrl.u32 %v1930, 7
    %v1932 = vsub.s32 %v1770, %v1931
    %v1933 = vrot.slane %v1088, %v1932
    %v1934 = vsel %vm1775, %v1933, %v1929
    %v1935 = vlaneseq
    %v1936 = vshrl.u32 %v1935, 7
    %v1937 = vsub.s32 %v1667, %v1936
    %v1938 = vrot.slane %v1089, %v1937
    %v1939 = vlaneseq
    %v1940 = vshrl.u32 %v1939, 7
    %v1941 = vsub.s32 %v1672, %v1940
    %v1942 = vrot.slane %v1090, %v1941
    %v1943 = vsel %vm1677, %v1942, %v1938
    %v1944 = vlaneseq
    %v1945 = vshrl.u32 %v1944, 7
    %v1946 = vsub.s32 %v1679, %v1945
    %v1947 = vrot.slane %v1091, %v1946
    %v1948 = vsel %vm1684, %v1947, %v1943
    %v1949 = vlaneseq
    %v1950 = vshrl.u32 %v1949, 7
    %v1951 = vsub.s32 %v1686, %v1950
    %v1952 = vrot.slane %v1092, %v1951
    %v1953 = vsel %vm1691, %v1952, %v1948
    %v1954 = vlaneseq
    %v1955 = vshrl.u32 %v1954, 7
    %v1956 = vsub.s32 %v1693, %v1955
    %v1957 = vrot.slane %v1093, %v1956
    %v1958 = vsel %vm1698, %v1957, %v1953
    %v1959 = vlaneseq
    %v1960 = vshrl.u32 %v1959, 7
    %v1961 = vsub.s32 %v1700, %v1960
    %v1962 = vrot.slane %v1094, %v1961
    %v1963 = vsel %vm1705, %v1962, %v1958
    %v1964 = vlaneseq
    %v1965 = vshrl.u32 %v1964, 7
    %v1966 = vsub.s32 %v1707, %v1965
    %v1967 = vrot.slane %v1095, %v1966
    %v1968 = vsel %vm1712, %v1967, %v1963
    %v1969 = vlaneseq
    %v1970 = vshrl.u32 %v1969, 7
    %v1971 = vsub.s32 %v1714, %v1970
    %v1972 = vrot.slane %v1096, %v1971
    %v1973 = vsel %vm1719, %v1972, %v1968
    %v1974 = vlaneseq
    %v1975 = vshrl.u32 %v1974, 7
    %v1976 = vsub.s32 %v1721, %v1975
    %v1977 = vrot.slane %v1097, %v1976
    %v1978 = vsel %vm1726, %v1977, %v1973
    %v1979 = vlaneseq
    %v1980 = vshrl.u32 %v1979, 7
    %v1981 = vsub.s32 %v1728, %v1980
    %v1982 = vrot.slane %v1098, %v1981
    %v1983 = vsel %vm1733, %v1982, %v1978
    %v1984 = vlaneseq
    %v1985 = vshrl.u32 %v1984, 7
    %v1986 = vsub.s32 %v1735, %v1985
    %v1987 = vrot.slane %v1099, %v1986
    %v1988 = vsel %vm1740, %v1987, %v1983
    %v1989 = vlaneseq
    %v1990 = vshrl.u32 %v1989, 7
    %v1991 = vsub.s32 %v1742, %v1990
    %v1992 = vrot.slane %v1100, %v1991
    %v1993 = vsel %vm1747, %v1992, %v1988
    %v1994 = vlaneseq
    %v1995 = vshrl.u32 %v1994, 7
    %v1996 = vsub.s32 %v1749, %v1995
    %v1997 = vrot.slane %v1101, %v1996
    %v1998 = vsel %vm1754, %v1997, %v1993
    %v1999 = vlaneseq
    %v2000 = vshrl.u32 %v1999, 7
    %v2001 = vsub.s32 %v1756, %v2000
    %v2002 = vrot.slane %v1102, %v2001
    %v2003 = vsel %vm1761, %v2002, %v1998
    %v2004 = vlaneseq
    %v2005 = vshrl.u32 %v2004, 7
    %v2006 = vsub.s32 %v1763, %v2005
    %v2007 = vrot.slane %v1103, %v2006
    %v2008 = vsel %vm1768, %v2007, %v2003
    %v2009 = vlaneseq
    %v2010 = vshrl.u32 %v2009, 7
    %v2011 = vsub.s32 %v1770, %v2010
    %v2012 = vrot.slane %v1104, %v2011
    %v2013 = vsel %vm1775, %v2012, %v2008
    %v2014 = vlaneseq
    %v2015 = vshrl.u32 %v2014, 7
    %v2016 = vsub.s32 %v1667, %v2015
    %v2017 = vrot.slane %v1105, %v2016
    %v2018 = vlaneseq
    %v2019 = vshrl.u32 %v2018, 7
    %v2020 = vsub.s32 %v1672, %v2019
    %v2021 = vrot.slane %v1106, %v2020
    %v2022 = vsel %vm1677, %v2021, %v2017
    %v2023 = vlaneseq
    %v2024 = vshrl.u32 %v2023, 7
    %v2025 = vsub.s32 %v1679, %v2024
    %v2026 = vrot.slane %v1107, %v2025
    %v2027 = vsel %vm1684, %v2026, %v2022
    %v2028 = vlaneseq
    %v2029 = vshrl.u32 %v2028, 7
    %v2030 = vsub.s32 %v1686, %v2029
    %v2031 = vrot.slane %v1108, %v2030
    %v2032 = vsel %vm1691, %v2031, %v2027
    %v2033 = vlaneseq
    %v2034 = vshrl.u32 %v2033, 7
    %v2035 = vsub.s32 %v1693, %v2034
    %v2036 = vrot.slane %v1109, %v2035
    %v2037 = vsel %vm1698, %v2036, %v2032
    %v2038 = vlaneseq
    %v2039 = vshrl.u32 %v2038, 7
    %v2040 = vsub.s32 %v1700, %v2039
    %v2041 = vrot.slane %v1110, %v2040
    %v2042 = vsel %vm1705, %v2041, %v2037
    %v2043 = vlaneseq
    %v2044 = vshrl.u32 %v2043, 7
    %v2045 = vsub.s32 %v1707, %v2044
    %v2046 = vrot.slane %v1111, %v2045
    %v2047 = vsel %vm1712, %v2046, %v2042
    %v2048 = vlaneseq
    %v2049 = vshrl.u32 %v2048, 7
    %v2050 = vsub.s32 %v1714, %v2049
    %v2051 = vrot.slane %v1112, %v2050
    %v2052 = vsel %vm1719, %v2051, %v2047
    %v2053 = vlaneseq
    %v2054 = vshrl.u32 %v2053, 7
    %v2055 = vsub.s32 %v1721, %v2054
    %v2056 = vrot.slane %v1113, %v2055
    %v2057 = vsel %vm1726, %v2056, %v2052
    %v2058 = vlaneseq
    %v2059 = vshrl.u32 %v2058, 7
    %v2060 = vsub.s32 %v1728, %v2059
    %v2061 = vrot.slane %v1114, %v2060
    %v2062 = vsel %vm1733, %v2061, %v2057
    %v2063 = vlaneseq
    %v2064 = vshrl.u32 %v2063, 7
    %v2065 = vsub.s32 %v1735, %v2064
    %v2066 = vrot.slane %v1115, %v2065
    %v2067 = vsel %vm1740, %v2066, %v2062
    %v2068 = vlaneseq
    %v2069 = vshrl.u32 %v2068, 7
    %v2070 = vsub.s32 %v1742, %v2069
    %v2071 = vrot.slane %v1116, %v2070
    %v2072 = vsel %vm1747, %v2071, %v2067
    %v2073 = vlaneseq
    %v2074 = vshrl.u32 %v2073, 7
    %v2075 = vsub.s32 %v1749, %v2074
    %v2076 = vrot.slane %v1117, %v2075
    %v2077 = vsel %vm1754, %v2076, %v2072
    %v2078 = vlaneseq
    %v2079 = vshrl.u32 %v2078, 7
    %v2080 = vsub.s32 %v1756, %v2079
    %v2081 = vrot.slane %v1118, %v2080
    %v2082 = vsel %vm1761, %v2081, %v2077
    %v2083 = vlaneseq
    %v2084 = vshrl.u32 %v2083, 7
    %v2085 = vsub.s32 %v1763, %v2084
    %v2086 = vrot.slane %v1119, %v2085
    %v2087 = vsel %vm1768, %v2086, %v2082
    %v2088 = vlaneseq
    %v2089 = vshrl.u32 %v2088, 7
    %v2090 = vsub.s32 %v1770, %v2089
    %v2091 = vrot.slane %v1120, %v2090
    %v2092 = vsel %vm1775, %v2091, %v2087
    %v2093 = vlaneseq
    %v2094 = vshrl.u32 %v2093, 7
    %v2095 = vsub.s32 %v1667, %v2094
    %v2096 = vrot.slane %v1121, %v2095
    %v2097 = vlaneseq
    %v2098 = vshrl.u32 %v2097, 7
    %v2099 = vsub.s32 %v1672, %v2098
    %v2100 = vrot.slane %v1122, %v2099
    %v2101 = vsel %vm1677, %v2100, %v2096
    %v2102 = vlaneseq
    %v2103 = vshrl.u32 %v2102, 7
    %v2104 = vsub.s32 %v1679, %v2103
    %v2105 = vrot.slane %v1123, %v2104
    %v2106 = vsel %vm1684, %v2105, %v2101
    %v2107 = vlaneseq
    %v2108 = vshrl.u32 %v2107, 7
    %v2109 = vsub.s32 %v1686, %v2108
    %v2110 = vrot.slane %v1124, %v2109
    %v2111 = vsel %vm1691, %v2110, %v2106
    %v2112 = vlaneseq
    %v2113 = vshrl.u32 %v2112, 7
    %v2114 = vsub.s32 %v1693, %v2113
    %v2115 = vrot.slane %v1125, %v2114
    %v2116 = vsel %vm1698, %v2115, %v2111
    %v2117 = vlaneseq
    %v2118 = vshrl.u32 %v2117, 7
    %v2119 = vsub.s32 %v1700, %v2118
    %v2120 = vrot.slane %v1126, %v2119
    %v2121 = vsel %vm1705, %v2120, %v2116
    %v2122 = vlaneseq
    %v2123 = vshrl.u32 %v2122, 7
    %v2124 = vsub.s32 %v1707, %v2123
    %v2125 = vrot.slane %v1127, %v2124
    %v2126 = vsel %vm1712, %v2125, %v2121
    %v2127 = vlaneseq
    %v2128 = vshrl.u32 %v2127, 7
    %v2129 = vsub.s32 %v1714, %v2128
    %v2130 = vrot.slane %v1128, %v2129
    %v2131 = vsel %vm1719, %v2130, %v2126
    %v2132 = vlaneseq
    %v2133 = vshrl.u32 %v2132, 7
    %v2134 = vsub.s32 %v1721, %v2133
    %v2135 = vrot.slane %v1129, %v2134
    %v2136 = vsel %vm1726, %v2135, %v2131
    %v2137 = vlaneseq
    %v2138 = vshrl.u32 %v2137, 7
    %v2139 = vsub.s32 %v1728, %v2138
    %v2140 = vrot.slane %v1130, %v2139
    %v2141 = vsel %vm1733, %v2140, %v2136
    %v2142 = vlaneseq
    %v2143 = vshrl.u32 %v2142, 7
    %v2144 = vsub.s32 %v1735, %v2143
    %v2145 = vrot.slane %v1131, %v2144
    %v2146 = vsel %vm1740, %v2145, %v2141
    %v2147 = vlaneseq
    %v2148 = vshrl.u32 %v2147, 7
    %v2149 = vsub.s32 %v1742, %v2148
    %v2150 = vrot.slane %v1132, %v2149
    %v2151 = vsel %vm1747, %v2150, %v2146
    %v2152 = vlaneseq
    %v2153 = vshrl.u32 %v2152, 7
    %v2154 = vsub.s32 %v1749, %v2153
    %v2155 = vrot.slane %v1133, %v2154
    %v2156 = vsel %vm1754, %v2155, %v2151
    %v2157 = vlaneseq
    %v2158 = vshrl.u32 %v2157, 7
    %v2159 = vsub.s32 %v1756, %v2158
    %v2160 = vrot.slane %v1134, %v2159
    %v2161 = vsel %vm1761, %v2160, %v2156
    %v2162 = vlaneseq
    %v2163 = vshrl.u32 %v2162, 7
    %v2164 = vsub.s32 %v1763, %v2163
    %v2165 = vrot.slane %v1135, %v2164
    %v2166 = vsel %vm1768, %v2165, %v2161
    %v2167 = vlaneseq
    %v2168 = vshrl.u32 %v2167, 7
    %v2169 = vsub.s32 %v1770, %v2168
    %v2170 = vrot.slane %v1136, %v2169
    %v2171 = vsel %vm1775, %v2170, %v2166
    %v2172 = vlaneseq
    %v2173 = vshrl.u32 %v2172, 7
    %v2174 = vsub.s32 %v1667, %v2173
    %v2175 = vrot.slane %v1137, %v2174
    %v2176 = vlaneseq
    %v2177 = vshrl.u32 %v2176, 7
    %v2178 = vsub.s32 %v1672, %v2177
    %v2179 = vrot.slane %v1138, %v2178
    %v2180 = vsel %vm1677, %v2179, %v2175
    %v2181 = vlaneseq
    %v2182 = vshrl.u32 %v2181, 7
    %v2183 = vsub.s32 %v1679, %v2182
    %v2184 = vrot.slane %v1139, %v2183
    %v2185 = vsel %vm1684, %v2184, %v2180
    %v2186 = vlaneseq
    %v2187 = vshrl.u32 %v2186, 7
    %v2188 = vsub.s32 %v1686, %v2187
    %v2189 = vrot.slane %v1140, %v2188
    %v2190 = vsel %vm1691, %v2189, %v2185
    %v2191 = vlaneseq
    %v2192 = vshrl.u32 %v2191, 7
    %v2193 = vsub.s32 %v1693, %v2192
    %v2194 = vrot.slane %v1141, %v2193
    %v2195 = vsel %vm1698, %v2194, %v2190
    %v2196 = vlaneseq
    %v2197 = vshrl.u32 %v2196, 7
    %v2198 = vsub.s32 %v1700, %v2197
    %v2199 = vrot.slane %v1142, %v2198
    %v2200 = vsel %vm1705, %v2199, %v2195
    %v2201 = vlaneseq
    %v2202 = vshrl.u32 %v2201, 7
    %v2203 = vsub.s32 %v1707, %v2202
    %v2204 = vrot.slane %v1143, %v2203
    %v2205 = vsel %vm1712, %v2204, %v2200
    %v2206 = vlaneseq
    %v2207 = vshrl.u32 %v2206, 7
    %v2208 = vsub.s32 %v1714, %v2207
    %v2209 = vrot.slane %v1144, %v2208
    %v2210 = vsel %vm1719, %v2209, %v2205
    %v2211 = vlaneseq
    %v2212 = vshrl.u32 %v2211, 7
    %v2213 = vsub.s32 %v1721, %v2212
    %v2214 = vrot.slane %v1145, %v2213
    %v2215 = vsel %vm1726, %v2214, %v2210
    %v2216 = vlaneseq
    %v2217 = vshrl.u32 %v2216, 7
    %v2218 = vsub.s32 %v1728, %v2217
    %v2219 = vrot.slane %v1146, %v2218
    %v2220 = vsel %vm1733, %v2219, %v2215
    %v2221 = vlaneseq
    %v2222 = vshrl.u32 %v2221, 7
    %v2223 = vsub.s32 %v1735, %v2222
    %v2224 = vrot.slane %v1147, %v2223
    %v2225 = vsel %vm1740, %v2224, %v2220
    %v2226 = vlaneseq
    %v2227 = vshrl.u32 %v2226, 7
    %v2228 = vsub.s32 %v1742, %v2227
    %v2229 = vrot.slane %v1148, %v2228
    %v2230 = vsel %vm1747, %v2229, %v2225
    %v2231 = vlaneseq
    %v2232 = vshrl.u32 %v2231, 7
    %v2233 = vsub.s32 %v1749, %v2232
    %v2234 = vrot.slane %v1149, %v2233
    %v2235 = vsel %vm1754, %v2234, %v2230
    %v2236 = vlaneseq
    %v2237 = vshrl.u32 %v2236, 7
    %v2238 = vsub.s32 %v1756, %v2237
    %v2239 = vrot.slane %v1150, %v2238
    %v2240 = vsel %vm1761, %v2239, %v2235
    %v2241 = vlaneseq
    %v2242 = vshrl.u32 %v2241, 7
    %v2243 = vsub.s32 %v1763, %v2242
    %v2244 = vrot.slane %v1151, %v2243
    %v2245 = vsel %vm1768, %v2244, %v2240
    %v2246 = vlaneseq
    %v2247 = vshrl.u32 %v2246, 7
    %v2248 = vsub.s32 %v1770, %v2247
    %v2249 = vrot.slane %v1152, %v2248
    %v2250 = vsel %vm1775, %v2249, %v2245
    %v2251 = vlaneseq
    %v2252 = vshrl.u32 %v2251, 7
    %v2253 = vsub.s32 %v1667, %v2252
    %v2254 = vrot.slane %v1153, %v2253
    %v2255 = vlaneseq
    %v2256 = vshrl.u32 %v2255, 7
    %v2257 = vsub.s32 %v1672, %v2256
    %v2258 = vrot.slane %v1154, %v2257
    %v2259 = vsel %vm1677, %v2258, %v2254
    %v2260 = vlaneseq
    %v2261 = vshrl.u32 %v2260, 7
    %v2262 = vsub.s32 %v1679, %v2261
    %v2263 = vrot.slane %v1155, %v2262
    %v2264 = vsel %vm1684, %v2263, %v2259
    %v2265 = vlaneseq
    %v2266 = vshrl.u32 %v2265, 7
    %v2267 = vsub.s32 %v1686, %v2266
    %v2268 = vrot.slane %v1156, %v2267
    %v2269 = vsel %vm1691, %v2268, %v2264
    %v2270 = vlaneseq
    %v2271 = vshrl.u32 %v2270, 7
    %v2272 = vsub.s32 %v1693, %v2271
    %v2273 = vrot.slane %v1157, %v2272
    %v2274 = vsel %vm1698, %v2273, %v2269
    %v2275 = vlaneseq
    %v2276 = vshrl.u32 %v2275, 7
    %v2277 = vsub.s32 %v1700, %v2276
    %v2278 = vrot.slane %v1158, %v2277
    %v2279 = vsel %vm1705, %v2278, %v2274
    %v2280 = vlaneseq
    %v2281 = vshrl.u32 %v2280, 7
    %v2282 = vsub.s32 %v1707, %v2281
    %v2283 = vrot.slane %v1159, %v2282
    %v2284 = vsel %vm1712, %v2283, %v2279
    %v2285 = vlaneseq
    %v2286 = vshrl.u32 %v2285, 7
    %v2287 = vsub.s32 %v1714, %v2286
    %v2288 = vrot.slane %v1160, %v2287
    %v2289 = vsel %vm1719, %v2288, %v2284
    %v2290 = vlaneseq
    %v2291 = vshrl.u32 %v2290, 7
    %v2292 = vsub.s32 %v1721, %v2291
    %v2293 = vrot.slane %v1161, %v2292
    %v2294 = vsel %vm1726, %v2293, %v2289
    %v2295 = vlaneseq
    %v2296 = vshrl.u32 %v2295, 7
    %v2297 = vsub.s32 %v1728, %v2296
    %v2298 = vrot.slane %v1162, %v2297
    %v2299 = vsel %vm1733, %v2298, %v2294
    %v2300 = vlaneseq
    %v2301 = vshrl.u32 %v2300, 7
    %v2302 = vsub.s32 %v1735, %v2301
    %v2303 = vrot.slane %v1163, %v2302
    %v2304 = vsel %vm1740, %v2303, %v2299
    %v2305 = vlaneseq
    %v2306 = vshrl.u32 %v2305, 7
    %v2307 = vsub.s32 %v1742, %v2306
    %v2308 = vrot.slane %v1164, %v2307
    %v2309 = vsel %vm1747, %v2308, %v2304
    %v2310 = vlaneseq
    %v2311 = vshrl.u32 %v2310, 7
    %v2312 = vsub.s32 %v1749, %v2311
    %v2313 = vrot.slane %v1165, %v2312
    %v2314 = vsel %vm1754, %v2313, %v2309
    %v2315 = vlaneseq
    %v2316 = vshrl.u32 %v2315, 7
    %v2317 = vsub.s32 %v1756, %v2316
    %v2318 = vrot.slane %v1166, %v2317
    %v2319 = vsel %vm1761, %v2318, %v2314
    %v2320 = vlaneseq
    %v2321 = vshrl.u32 %v2320, 7
    %v2322 = vsub.s32 %v1763, %v2321
    %v2323 = vrot.slane %v1167, %v2322
    %v2324 = vsel %vm1768, %v2323, %v2319
    %v2325 = vlaneseq
    %v2326 = vshrl.u32 %v2325, 7
    %v2327 = vsub.s32 %v1770, %v2326
    %v2328 = vrot.slane %v1168, %v2327
    %v2329 = vsel %vm1775, %v2328, %v2324
    %v2330 = vlaneseq
    %v2331 = vshrl.u32 %v2330, 7
    %v2332 = vsub.s32 %v1667, %v2331
    %v2333 = vrot.slane %v1169, %v2332
    %v2334 = vlaneseq
    %v2335 = vshrl.u32 %v2334, 7
    %v2336 = vsub.s32 %v1672, %v2335
    %v2337 = vrot.slane %v1170, %v2336
    %v2338 = vsel %vm1677, %v2337, %v2333
    %v2339 = vlaneseq
    %v2340 = vshrl.u32 %v2339, 7
    %v2341 = vsub.s32 %v1679, %v2340
    %v2342 = vrot.slane %v1171, %v2341
    %v2343 = vsel %vm1684, %v2342, %v2338
    %v2344 = vlaneseq
    %v2345 = vshrl.u32 %v2344, 7
    %v2346 = vsub.s32 %v1686, %v2345
    %v2347 = vrot.slane %v1172, %v2346
    %v2348 = vsel %vm1691, %v2347, %v2343
    %v2349 = vlaneseq
    %v2350 = vshrl.u32 %v2349, 7
    %v2351 = vsub.s32 %v1693, %v2350
    %v2352 = vrot.slane %v1173, %v2351
    %v2353 = vsel %vm1698, %v2352, %v2348
    %v2354 = vlaneseq
    %v2355 = vshrl.u32 %v2354, 7
    %v2356 = vsub.s32 %v1700, %v2355
    %v2357 = vrot.slane %v1174, %v2356
    %v2358 = vsel %vm1705, %v2357, %v2353
    %v2359 = vlaneseq
    %v2360 = vshrl.u32 %v2359, 7
    %v2361 = vsub.s32 %v1707, %v2360
    %v2362 = vrot.slane %v1175, %v2361
    %v2363 = vsel %vm1712, %v2362, %v2358
    %v2364 = vlaneseq
    %v2365 = vshrl.u32 %v2364, 7
    %v2366 = vsub.s32 %v1714, %v2365
    %v2367 = vrot.slane %v1176, %v2366
    %v2368 = vsel %vm1719, %v2367, %v2363
    %v2369 = vlaneseq
    %v2370 = vshrl.u32 %v2369, 7
    %v2371 = vsub.s32 %v1721, %v2370
    %v2372 = vrot.slane %v1177, %v2371
    %v2373 = vsel %vm1726, %v2372, %v2368
    %v2374 = vlaneseq
    %v2375 = vshrl.u32 %v2374, 7
    %v2376 = vsub.s32 %v1728, %v2375
    %v2377 = vrot.slane %v1178, %v2376
    %v2378 = vsel %vm1733, %v2377, %v2373
    %v2379 = vlaneseq
    %v2380 = vshrl.u32 %v2379, 7
    %v2381 = vsub.s32 %v1735, %v2380
    %v2382 = vrot.slane %v1179, %v2381
    %v2383 = vsel %vm1740, %v2382, %v2378
    %v2384 = vlaneseq
    %v2385 = vshrl.u32 %v2384, 7
    %v2386 = vsub.s32 %v1742, %v2385
    %v2387 = vrot.slane %v1180, %v2386
    %v2388 = vsel %vm1747, %v2387, %v2383
    %v2389 = vlaneseq
    %v2390 = vshrl.u32 %v2389, 7
    %v2391 = vsub.s32 %v1749, %v2390
    %v2392 = vrot.slane %v1181, %v2391
    %v2393 = vsel %vm1754, %v2392, %v2388
    %v2394 = vlaneseq
    %v2395 = vshrl.u32 %v2394, 7
    %v2396 = vsub.s32 %v1756, %v2395
    %v2397 = vrot.slane %v1182, %v2396
    %v2398 = vsel %vm1761, %v2397, %v2393
    %v2399 = vlaneseq
    %v2400 = vshrl.u32 %v2399, 7
    %v2401 = vsub.s32 %v1763, %v2400
    %v2402 = vrot.slane %v1183, %v2401
    %v2403 = vsel %vm1768, %v2402, %v2398
    %v2404 = vlaneseq
    %v2405 = vshrl.u32 %v2404, 7
    %v2406 = vsub.s32 %v1770, %v2405
    %v2407 = vrot.slane %v1184, %v2406
    %v2408 = vsel %vm1775, %v2407, %v2403
    %v2409 = vlaneseq
    %v2410 = vshrl.u32 %v2409, 7
    %v2411 = vsub.s32 %v1667, %v2410
    %v2412 = vrot.slane %v1185, %v2411
    %v2413 = vlaneseq
    %v2414 = vshrl.u32 %v2413, 7
    %v2415 = vsub.s32 %v1672, %v2414
    %v2416 = vrot.slane %v1186, %v2415
    %v2417 = vsel %vm1677, %v2416, %v2412
    %v2418 = vlaneseq
    %v2419 = vshrl.u32 %v2418, 7
    %v2420 = vsub.s32 %v1679, %v2419
    %v2421 = vrot.slane %v1187, %v2420
    %v2422 = vsel %vm1684, %v2421, %v2417
    %v2423 = vlaneseq
    %v2424 = vshrl.u32 %v2423, 7
    %v2425 = vsub.s32 %v1686, %v2424
    %v2426 = vrot.slane %v1188, %v2425
    %v2427 = vsel %vm1691, %v2426, %v2422
    %v2428 = vlaneseq
    %v2429 = vshrl.u32 %v2428, 7
    %v2430 = vsub.s32 %v1693, %v2429
    %v2431 = vrot.slane %v1189, %v2430
    %v2432 = vsel %vm1698, %v2431, %v2427
    %v2433 = vlaneseq
    %v2434 = vshrl.u32 %v2433, 7
    %v2435 = vsub.s32 %v1700, %v2434
    %v2436 = vrot.slane %v1190, %v2435
    %v2437 = vsel %vm1705, %v2436, %v2432
    %v2438 = vlaneseq
    %v2439 = vshrl.u32 %v2438, 7
    %v2440 = vsub.s32 %v1707, %v2439
    %v2441 = vrot.slane %v1191, %v2440
    %v2442 = vsel %vm1712, %v2441, %v2437
    %v2443 = vlaneseq
    %v2444 = vshrl.u32 %v2443, 7
    %v2445 = vsub.s32 %v1714, %v2444
    %v2446 = vrot.slane %v1192, %v2445
    %v2447 = vsel %vm1719, %v2446, %v2442
    %v2448 = vlaneseq
    %v2449 = vshrl.u32 %v2448, 7
    %v2450 = vsub.s32 %v1721, %v2449
    %v2451 = vrot.slane %v1193, %v2450
    %v2452 = vsel %vm1726, %v2451, %v2447
    %v2453 = vlaneseq
    %v2454 = vshrl.u32 %v2453, 7
    %v2455 = vsub.s32 %v1728, %v2454
    %v2456 = vrot.slane %v1194, %v2455
    %v2457 = vsel %vm1733, %v2456, %v2452
    %v2458 = vlaneseq
    %v2459 = vshrl.u32 %v2458, 7
    %v2460 = vsub.s32 %v1735, %v2459
    %v2461 = vrot.slane %v1195, %v2460
    %v2462 = vsel %vm1740, %v2461, %v2457
    %v2463 = vlaneseq
    %v2464 = vshrl.u32 %v2463, 7
    %v2465 = vsub.s32 %v1742, %v2464
    %v2466 = vrot.slane %v1196, %v2465
    %v2467 = vsel %vm1747, %v2466, %v2462
    %v2468 = vlaneseq
    %v2469 = vshrl.u32 %v2468, 7
    %v2470 = vsub.s32 %v1749, %v2469
    %v2471 = vrot.slane %v1197, %v2470
    %v2472 = vsel %vm1754, %v2471, %v2467
    %v2473 = vlaneseq
    %v2474 = vshrl.u32 %v2473, 7
    %v2475 = vsub.s32 %v1756, %v2474
    %v2476 = vrot.slane %v1198, %v2475
    %v2477 = vsel %vm1761, %v2476, %v2472
    %v2478 = vlaneseq
    %v2479 = vshrl.u32 %v2478, 7
    %v2480 = vsub.s32 %v1763, %v2479
    %v2481 = vrot.slane %v1199, %v2480
    %v2482 = vsel %vm1768, %v2481, %v2477
    %v2483 = vlaneseq
    %v2484 = vshrl.u32 %v2483, 7
    %v2485 = vsub.s32 %v1770, %v2484
    %v2486 = vrot.slane %v1200, %v2485
    %v2487 = vsel %vm1775, %v2486, %v2482
    %v2488 = vlaneseq
    %v2489 = vshrl.u32 %v2488, 7
    %v2490 = vsub.s32 %v1667, %v2489
    %v2491 = vrot.slane %v1201, %v2490
    %v2492 = vlaneseq
    %v2493 = vshrl.u32 %v2492, 7
    %v2494 = vsub.s32 %v1672, %v2493
    %v2495 = vrot.slane %v1202, %v2494
    %v2496 = vsel %vm1677, %v2495, %v2491
    %v2497 = vlaneseq
    %v2498 = vshrl.u32 %v2497, 7
    %v2499 = vsub.s32 %v1679, %v2498
    %v2500 = vrot.slane %v1203, %v2499
    %v2501 = vsel %vm1684, %v2500, %v2496
    %v2502 = vlaneseq
    %v2503 = vshrl.u32 %v2502, 7
    %v2504 = vsub.s32 %v1686, %v2503
    %v2505 = vrot.slane %v1204, %v2504
    %v2506 = vsel %vm1691, %v2505, %v2501
    %v2507 = vlaneseq
    %v2508 = vshrl.u32 %v2507, 7
    %v2509 = vsub.s32 %v1693, %v2508
    %v2510 = vrot.slane %v1205, %v2509
    %v2511 = vsel %vm1698, %v2510, %v2506
    %v2512 = vlaneseq
    %v2513 = vshrl.u32 %v2512, 7
    %v2514 = vsub.s32 %v1700, %v2513
    %v2515 = vrot.slane %v1206, %v2514
    %v2516 = vsel %vm1705, %v2515, %v2511
    %v2517 = vlaneseq
    %v2518 = vshrl.u32 %v2517, 7
    %v2519 = vsub.s32 %v1707, %v2518
    %v2520 = vrot.slane %v1207, %v2519
    %v2521 = vsel %vm1712, %v2520, %v2516
    %v2522 = vlaneseq
    %v2523 = vshrl.u32 %v2522, 7
    %v2524 = vsub.s32 %v1714, %v2523
    %v2525 = vrot.slane %v1208, %v2524
    %v2526 = vsel %vm1719, %v2525, %v2521
    %v2527 = vlaneseq
    %v2528 = vshrl.u32 %v2527, 7
    %v2529 = vsub.s32 %v1721, %v2528
    %v2530 = vrot.slane %v1209, %v2529
    %v2531 = vsel %vm1726, %v2530, %v2526
    %v2532 = vlaneseq
    %v2533 = vshrl.u32 %v2532, 7
    %v2534 = vsub.s32 %v1728, %v2533
    %v2535 = vrot.slane %v1210, %v2534
    %v2536 = vsel %vm1733, %v2535, %v2531
    %v2537 = vlaneseq
    %v2538 = vshrl.u32 %v2537, 7
    %v2539 = vsub.s32 %v1735, %v2538
    %v2540 = vrot.slane %v1211, %v2539
    %v2541 = vsel %vm1740, %v2540, %v2536
    %v2542 = vlaneseq
    %v2543 = vshrl.u32 %v2542, 7
    %v2544 = vsub.s32 %v1742, %v2543
    %v2545 = vrot.slane %v1212, %v2544
    %v2546 = vsel %vm1747, %v2545, %v2541
    %v2547 = vlaneseq
    %v2548 = vshrl.u32 %v2547, 7
    %v2549 = vsub.s32 %v1749, %v2548
    %v2550 = vrot.slane %v1213, %v2549
    %v2551 = vsel %vm1754, %v2550, %v2546
    %v2552 = vlaneseq
    %v2553 = vshrl.u32 %v2552, 7
    %v2554 = vsub.s32 %v1756, %v2553
    %v2555 = vrot.slane %v1214, %v2554
    %v2556 = vsel %vm1761, %v2555, %v2551
    %v2557 = vlaneseq
    %v2558 = vshrl.u32 %v2557, 7
    %v2559 = vsub.s32 %v1763, %v2558
    %v2560 = vrot.slane %v1215, %v2559
    %v2561 = vsel %vm1768, %v2560, %v2556
    %v2562 = vlaneseq
    %v2563 = vshrl.u32 %v2562, 7
    %v2564 = vsub.s32 %v1770, %v2563
    %v2565 = vrot.slane %v1216, %v2564
    %v2566 = vsel %vm1775, %v2565, %v2561
    %v2567 = vlaneseq
    %v2568 = vshrl.u32 %v2567, 7
    %v2569 = vsub.s32 %v1667, %v2568
    %v2570 = vrot.slane %v1217, %v2569
    %v2571 = vlaneseq
    %v2572 = vshrl.u32 %v2571, 7
    %v2573 = vsub.s32 %v1672, %v2572
    %v2574 = vrot.slane %v1218, %v2573
    %v2575 = vsel %vm1677, %v2574, %v2570
    %v2576 = vlaneseq
    %v2577 = vshrl.u32 %v2576, 7
    %v2578 = vsub.s32 %v1679, %v2577
    %v2579 = vrot.slane %v1219, %v2578
    %v2580 = vsel %vm1684, %v2579, %v2575
    %v2581 = vlaneseq
    %v2582 = vshrl.u32 %v2581, 7
    %v2583 = vsub.s32 %v1686, %v2582
    %v2584 = vrot.slane %v1220, %v2583
    %v2585 = vsel %vm1691, %v2584, %v2580
    %v2586 = vlaneseq
    %v2587 = vshrl.u32 %v2586, 7
    %v2588 = vsub.s32 %v1693, %v2587
    %v2589 = vrot.slane %v1221, %v2588
    %v2590 = vsel %vm1698, %v2589, %v2585
    %v2591 = vlaneseq
    %v2592 = vshrl.u32 %v2591, 7
    %v2593 = vsub.s32 %v1700, %v2592
    %v2594 = vrot.slane %v1222, %v2593
    %v2595 = vsel %vm1705, %v2594, %v2590
    %v2596 = vlaneseq
    %v2597 = vshrl.u32 %v2596, 7
    %v2598 = vsub.s32 %v1707, %v2597
    %v2599 = vrot.slane %v1223, %v2598
    %v2600 = vsel %vm1712, %v2599, %v2595
    %v2601 = vlaneseq
    %v2602 = vshrl.u32 %v2601, 7
    %v2603 = vsub.s32 %v1714, %v2602
    %v2604 = vrot.slane %v1224, %v2603
    %v2605 = vsel %vm1719, %v2604, %v2600
    %v2606 = vlaneseq
    %v2607 = vshrl.u32 %v2606, 7
    %v2608 = vsub.s32 %v1721, %v2607
    %v2609 = vrot.slane %v1225, %v2608
    %v2610 = vsel %vm1726, %v2609, %v2605
    %v2611 = vlaneseq
    %v2612 = vshrl.u32 %v2611, 7
    %v2613 = vsub.s32 %v1728, %v2612
    %v2614 = vrot.slane %v1226, %v2613
    %v2615 = vsel %vm1733, %v2614, %v2610
    %v2616 = vlaneseq
    %v2617 = vshrl.u32 %v2616, 7
    %v2618 = vsub.s32 %v1735, %v2617
    %v2619 = vrot.slane %v1227, %v2618
    %v2620 = vsel %vm1740, %v2619, %v2615
    %v2621 = vlaneseq
    %v2622 = vshrl.u32 %v2621, 7
    %v2623 = vsub.s32 %v1742, %v2622
    %v2624 = vrot.slane %v1228, %v2623
    %v2625 = vsel %vm1747, %v2624, %v2620
    %v2626 = vlaneseq
    %v2627 = vshrl.u32 %v2626, 7
    %v2628 = vsub.s32 %v1749, %v2627
    %v2629 = vrot.slane %v1229, %v2628
    %v2630 = vsel %vm1754, %v2629, %v2625
    %v2631 = vlaneseq
    %v2632 = vshrl.u32 %v2631, 7
    %v2633 = vsub.s32 %v1756, %v2632
    %v2634 = vrot.slane %v1230, %v2633
    %v2635 = vsel %vm1761, %v2634, %v2630
    %v2636 = vlaneseq
    %v2637 = vshrl.u32 %v2636, 7
    %v2638 = vsub.s32 %v1763, %v2637
    %v2639 = vrot.slane %v1231, %v2638
    %v2640 = vsel %vm1768, %v2639, %v2635
    %v2641 = vlaneseq
    %v2642 = vshrl.u32 %v2641, 7
    %v2643 = vsub.s32 %v1770, %v2642
    %v2644 = vrot.slane %v1232, %v2643
    %v2645 = vsel %vm1775, %v2644, %v2640
    %v2646 = vlaneseq
    %v2647 = vshrl.u32 %v2646, 7
    %v2648 = vsub.s32 %v1667, %v2647
    %v2649 = vrot.slane %v1233, %v2648
    %v2650 = vlaneseq
    %v2651 = vshrl.u32 %v2650, 7
    %v2652 = vsub.s32 %v1672, %v2651
    %v2653 = vrot.slane %v1234, %v2652
    %v2654 = vsel %vm1677, %v2653, %v2649
    %v2655 = vlaneseq
    %v2656 = vshrl.u32 %v2655, 7
    %v2657 = vsub.s32 %v1679, %v2656
    %v2658 = vrot.slane %v1235, %v2657
    %v2659 = vsel %vm1684, %v2658, %v2654
    %v2660 = vlaneseq
    %v2661 = vshrl.u32 %v2660, 7
    %v2662 = vsub.s32 %v1686, %v2661
    %v2663 = vrot.slane %v1236, %v2662
    %v2664 = vsel %vm1691, %v2663, %v2659
    %v2665 = vlaneseq
    %v2666 = vshrl.u32 %v2665, 7
    %v2667 = vsub.s32 %v1693, %v2666
    %v2668 = vrot.slane %v1237, %v2667
    %v2669 = vsel %vm1698, %v2668, %v2664
    %v2670 = vlaneseq
    %v2671 = vshrl.u32 %v2670, 7
    %v2672 = vsub.s32 %v1700, %v2671
    %v2673 = vrot.slane %v1238, %v2672
    %v2674 = vsel %vm1705, %v2673, %v2669
    %v2675 = vlaneseq
    %v2676 = vshrl.u32 %v2675, 7
    %v2677 = vsub.s32 %v1707, %v2676
    %v2678 = vrot.slane %v1239, %v2677
    %v2679 = vsel %vm1712, %v2678, %v2674
    %v2680 = vlaneseq
    %v2681 = vshrl.u32 %v2680, 7
    %v2682 = vsub.s32 %v1714, %v2681
    %v2683 = vrot.slane %v1240, %v2682
    %v2684 = vsel %vm1719, %v2683, %v2679
    %v2685 = vlaneseq
    %v2686 = vshrl.u32 %v2685, 7
    %v2687 = vsub.s32 %v1721, %v2686
    %v2688 = vrot.slane %v1241, %v2687
    %v2689 = vsel %vm1726, %v2688, %v2684
    %v2690 = vlaneseq
    %v2691 = vshrl.u32 %v2690, 7
    %v2692 = vsub.s32 %v1728, %v2691
    %v2693 = vrot.slane %v1242, %v2692
    %v2694 = vsel %vm1733, %v2693, %v2689
    %v2695 = vlaneseq
    %v2696 = vshrl.u32 %v2695, 7
    %v2697 = vsub.s32 %v1735, %v2696
    %v2698 = vrot.slane %v1243, %v2697
    %v2699 = vsel %vm1740, %v2698, %v2694
    %v2700 = vlaneseq
    %v2701 = vshrl.u32 %v2700, 7
    %v2702 = vsub.s32 %v1742, %v2701
    %v2703 = vrot.slane %v1244, %v2702
    %v2704 = vsel %vm1747, %v2703, %v2699
    %v2705 = vlaneseq
    %v2706 = vshrl.u32 %v2705, 7
    %v2707 = vsub.s32 %v1749, %v2706
    %v2708 = vrot.slane %v1245, %v2707
    %v2709 = vsel %vm1754, %v2708, %v2704
    %v2710 = vlaneseq
    %v2711 = vshrl.u32 %v2710, 7
    %v2712 = vsub.s32 %v1756, %v2711
    %v2713 = vrot.slane %v1246, %v2712
    %v2714 = vsel %vm1761, %v2713, %v2709
    %v2715 = vlaneseq
    %v2716 = vshrl.u32 %v2715, 7
    %v2717 = vsub.s32 %v1763, %v2716
    %v2718 = vrot.slane %v1247, %v2717
    %v2719 = vsel %vm1768, %v2718, %v2714
    %v2720 = vlaneseq
    %v2721 = vshrl.u32 %v2720, 7
    %v2722 = vsub.s32 %v1770, %v2721
    %v2723 = vrot.slane %v1248, %v2722
    %v2724 = vsel %vm1775, %v2723, %v2719
    %v2725 = vlaneseq
    %v2726 = vshrl.u32 %v2725, 7
    %v2727 = vsub.s32 %v1667, %v2726
    %v2728 = vrot.slane %v1249, %v2727
    %v2729 = vlaneseq
    %v2730 = vshrl.u32 %v2729, 7
    %v2731 = vsub.s32 %v1672, %v2730
    %v2732 = vrot.slane %v1250, %v2731
    %v2733 = vsel %vm1677, %v2732, %v2728
    %v2734 = vlaneseq
    %v2735 = vshrl.u32 %v2734, 7
    %v2736 = vsub.s32 %v1679, %v2735
    %v2737 = vrot.slane %v1251, %v2736
    %v2738 = vsel %vm1684, %v2737, %v2733
    %v2739 = vlaneseq
    %v2740 = vshrl.u32 %v2739, 7
    %v2741 = vsub.s32 %v1686, %v2740
    %v2742 = vrot.slane %v1252, %v2741
    %v2743 = vsel %vm1691, %v2742, %v2738
    %v2744 = vlaneseq
    %v2745 = vshrl.u32 %v2744, 7
    %v2746 = vsub.s32 %v1693, %v2745
    %v2747 = vrot.slane %v1253, %v2746
    %v2748 = vsel %vm1698, %v2747, %v2743
    %v2749 = vlaneseq
    %v2750 = vshrl.u32 %v2749, 7
    %v2751 = vsub.s32 %v1700, %v2750
    %v2752 = vrot.slane %v1254, %v2751
    %v2753 = vsel %vm1705, %v2752, %v2748
    %v2754 = vlaneseq
    %v2755 = vshrl.u32 %v2754, 7
    %v2756 = vsub.s32 %v1707, %v2755
    %v2757 = vrot.slane %v1255, %v2756
    %v2758 = vsel %vm1712, %v2757, %v2753
    %v2759 = vlaneseq
    %v2760 = vshrl.u32 %v2759, 7
    %v2761 = vsub.s32 %v1714, %v2760
    %v2762 = vrot.slane %v1256, %v2761
    %v2763 = vsel %vm1719, %v2762, %v2758
    %v2764 = vlaneseq
    %v2765 = vshrl.u32 %v2764, 7
    %v2766 = vsub.s32 %v1721, %v2765
    %v2767 = vrot.slane %v1257, %v2766
    %v2768 = vsel %vm1726, %v2767, %v2763
    %v2769 = vlaneseq
    %v2770 = vshrl.u32 %v2769, 7
    %v2771 = vsub.s32 %v1728, %v2770
    %v2772 = vrot.slane %v1258, %v2771
    %v2773 = vsel %vm1733, %v2772, %v2768
    %v2774 = vlaneseq
    %v2775 = vshrl.u32 %v2774, 7
    %v2776 = vsub.s32 %v1735, %v2775
    %v2777 = vrot.slane %v1259, %v2776
    %v2778 = vsel %vm1740, %v2777, %v2773
    %v2779 = vlaneseq
    %v2780 = vshrl.u32 %v2779, 7
    %v2781 = vsub.s32 %v1742, %v2780
    %v2782 = vrot.slane %v1260, %v2781
    %v2783 = vsel %vm1747, %v2782, %v2778
    %v2784 = vlaneseq
    %v2785 = vshrl.u32 %v2784, 7
    %v2786 = vsub.s32 %v1749, %v2785
    %v2787 = vrot.slane %v1261, %v2786
    %v2788 = vsel %vm1754, %v2787, %v2783
    %v2789 = vlaneseq
    %v2790 = vshrl.u32 %v2789, 7
    %v2791 = vsub.s32 %v1756, %v2790
    %v2792 = vrot.slane %v1262, %v2791
    %v2793 = vsel %vm1761, %v2792, %v2788
    %v2794 = vlaneseq
    %v2795 = vshrl.u32 %v2794, 7
    %v2796 = vsub.s32 %v1763, %v2795
    %v2797 = vrot.slane %v1263, %v2796
    %v2798 = vsel %vm1768, %v2797, %v2793
    %v2799 = vlaneseq
    %v2800 = vshrl.u32 %v2799, 7
    %v2801 = vsub.s32 %v1770, %v2800
    %v2802 = vrot.slane %v1264, %v2801
    %v2803 = vsel %vm1775, %v2802, %v2798
    %v2804 = vlaneseq
    %v2805 = vshrl.u32 %v2804, 7
    %v2806 = vsub.s32 %v1667, %v2805
    %v2807 = vrot.slane %v1265, %v2806
    %v2808 = vlaneseq
    %v2809 = vshrl.u32 %v2808, 7
    %v2810 = vsub.s32 %v1672, %v2809
    %v2811 = vrot.slane %v1266, %v2810
    %v2812 = vsel %vm1677, %v2811, %v2807
    %v2813 = vlaneseq
    %v2814 = vshrl.u32 %v2813, 7
    %v2815 = vsub.s32 %v1679, %v2814
    %v2816 = vrot.slane %v1267, %v2815
    %v2817 = vsel %vm1684, %v2816, %v2812
    %v2818 = vlaneseq
    %v2819 = vshrl.u32 %v2818, 7
    %v2820 = vsub.s32 %v1686, %v2819
    %v2821 = vrot.slane %v1268, %v2820
    %v2822 = vsel %vm1691, %v2821, %v2817
    %v2823 = vlaneseq
    %v2824 = vshrl.u32 %v2823, 7
    %v2825 = vsub.s32 %v1693, %v2824
    %v2826 = vrot.slane %v1269, %v2825
    %v2827 = vsel %vm1698, %v2826, %v2822
    %v2828 = vlaneseq
    %v2829 = vshrl.u32 %v2828, 7
    %v2830 = vsub.s32 %v1700, %v2829
    %v2831 = vrot.slane %v1270, %v2830
    %v2832 = vsel %vm1705, %v2831, %v2827
    %v2833 = vlaneseq
    %v2834 = vshrl.u32 %v2833, 7
    %v2835 = vsub.s32 %v1707, %v2834
    %v2836 = vrot.slane %v1271, %v2835
    %v2837 = vsel %vm1712, %v2836, %v2832
    %v2838 = vlaneseq
    %v2839 = vshrl.u32 %v2838, 7
    %v2840 = vsub.s32 %v1714, %v2839
    %v2841 = vrot.slane %v1272, %v2840
    %v2842 = vsel %vm1719, %v2841, %v2837
    %v2843 = vlaneseq
    %v2844 = vshrl.u32 %v2843, 7
    %v2845 = vsub.s32 %v1721, %v2844
    %v2846 = vrot.slane %v1273, %v2845
    %v2847 = vsel %vm1726, %v2846, %v2842
    %v2848 = vlaneseq
    %v2849 = vshrl.u32 %v2848, 7
    %v2850 = vsub.s32 %v1728, %v2849
    %v2851 = vrot.slane %v1274, %v2850
    %v2852 = vsel %vm1733, %v2851, %v2847
    %v2853 = vlaneseq
    %v2854 = vshrl.u32 %v2853, 7
    %v2855 = vsub.s32 %v1735, %v2854
    %v2856 = vrot.slane %v1275, %v2855
    %v2857 = vsel %vm1740, %v2856, %v2852
    %v2858 = vlaneseq
    %v2859 = vshrl.u32 %v2858, 7
    %v2860 = vsub.s32 %v1742, %v2859
    %v2861 = vrot.slane %v1276, %v2860
    %v2862 = vsel %vm1747, %v2861, %v2857
    %v2863 = vlaneseq
    %v2864 = vshrl.u32 %v2863, 7
    %v2865 = vsub.s32 %v1749, %v2864
    %v2866 = vrot.slane %v1277, %v2865
    %v2867 = vsel %vm1754, %v2866, %v2862
    %v2868 = vlaneseq
    %v2869 = vshrl.u32 %v2868, 7
    %v2870 = vsub.s32 %v1756, %v2869
    %v2871 = vrot.slane %v1278, %v2870
    %v2872 = vsel %vm1761, %v2871, %v2867
    %v2873 = vlaneseq
    %v2874 = vshrl.u32 %v2873, 7
    %v2875 = vsub.s32 %v1763, %v2874
    %v2876 = vrot.slane %v1279, %v2875
    %v2877 = vsel %vm1768, %v2876, %v2872
    %v2878 = vlaneseq
    %v2879 = vshrl.u32 %v2878, 7
    %v2880 = vsub.s32 %v1770, %v2879
    %v2881 = vrot.slane %v1280, %v2880
    %v2882 = vsel %vm1775, %v2881, %v2877
    %v2883 = vlaneseq
    %v2884 = vshrl.u32 %v2883, 7
    %v2885 = vsub.s32 %v1667, %v2884
    %v2886 = vrot.slane %v1281, %v2885
    %v2887 = vlaneseq
    %v2888 = vshrl.u32 %v2887, 7
    %v2889 = vsub.s32 %v1672, %v2888
    %v2890 = vrot.slane %v1282, %v2889
    %v2891 = vsel %vm1677, %v2890, %v2886
    %v2892 = vlaneseq
    %v2893 = vshrl.u32 %v2892, 7
    %v2894 = vsub.s32 %v1679, %v2893
    %v2895 = vrot.slane %v1283, %v2894
    %v2896 = vsel %vm1684, %v2895, %v2891
    %v2897 = vlaneseq
    %v2898 = vshrl.u32 %v2897, 7
    %v2899 = vsub.s32 %v1686, %v2898
    %v2900 = vrot.slane %v1284, %v2899
    %v2901 = vsel %vm1691, %v2900, %v2896
    %v2902 = vlaneseq
    %v2903 = vshrl.u32 %v2902, 7
    %v2904 = vsub.s32 %v1693, %v2903
    %v2905 = vrot.slane %v1285, %v2904
    %v2906 = vsel %vm1698, %v2905, %v2901
    %v2907 = vlaneseq
    %v2908 = vshrl.u32 %v2907, 7
    %v2909 = vsub.s32 %v1700, %v2908
    %v2910 = vrot.slane %v1286, %v2909
    %v2911 = vsel %vm1705, %v2910, %v2906
    %v2912 = vlaneseq
    %v2913 = vshrl.u32 %v2912, 7
    %v2914 = vsub.s32 %v1707, %v2913
    %v2915 = vrot.slane %v1287, %v2914
    %v2916 = vsel %vm1712, %v2915, %v2911
    %v2917 = vlaneseq
    %v2918 = vshrl.u32 %v2917, 7
    %v2919 = vsub.s32 %v1714, %v2918
    %v2920 = vrot.slane %v1288, %v2919
    %v2921 = vsel %vm1719, %v2920, %v2916
    %v2922 = vlaneseq
    %v2923 = vshrl.u32 %v2922, 7
    %v2924 = vsub.s32 %v1721, %v2923
    %v2925 = vrot.slane %v1289, %v2924
    %v2926 = vsel %vm1726, %v2925, %v2921
    %v2927 = vlaneseq
    %v2928 = vshrl.u32 %v2927, 7
    %v2929 = vsub.s32 %v1728, %v2928
    %v2930 = vrot.slane %v1290, %v2929
    %v2931 = vsel %vm1733, %v2930, %v2926
    %v2932 = vlaneseq
    %v2933 = vshrl.u32 %v2932, 7
    %v2934 = vsub.s32 %v1735, %v2933
    %v2935 = vrot.slane %v1291, %v2934
    %v2936 = vsel %vm1740, %v2935, %v2931
    %v2937 = vlaneseq
    %v2938 = vshrl.u32 %v2937, 7
    %v2939 = vsub.s32 %v1742, %v2938
    %v2940 = vrot.slane %v1292, %v2939
    %v2941 = vsel %vm1747, %v2940, %v2936
    %v2942 = vlaneseq
    %v2943 = vshrl.u32 %v2942, 7
    %v2944 = vsub.s32 %v1749, %v2943
    %v2945 = vrot.slane %v1293, %v2944
    %v2946 = vsel %vm1754, %v2945, %v2941
    %v2947 = vlaneseq
    %v2948 = vshrl.u32 %v2947, 7
    %v2949 = vsub.s32 %v1756, %v2948
    %v2950 = vrot.slane %v1294, %v2949
    %v2951 = vsel %vm1761, %v2950, %v2946
    %v2952 = vlaneseq
    %v2953 = vshrl.u32 %v2952, 7
    %v2954 = vsub.s32 %v1763, %v2953
    %v2955 = vrot.slane %v1295, %v2954
    %v2956 = vsel %vm1768, %v2955, %v2951
    %v2957 = vlaneseq
    %v2958 = vshrl.u32 %v2957, 7
    %v2959 = vsub.s32 %v1770, %v2958
    %v2960 = vrot.slane %v1296, %v2959
    %v2961 = vsel %vm1775, %v2960, %v2956
    %vm2962 = vcmask 1041409
    %v2963 = vsel %vm2962, %v1934, %v1776
    %vm2964 = vcmask 1042434
    %v2965 = vsel %vm2964, %v2092, %v2963
    %vm2966 = vcmask 1043459
    %v2967 = vsel %vm2966, %v2250, %v2965
    %vm2968 = vcmask 1044484
    %v2969 = vsel %vm2968, %v2408, %v2967
    %vm2970 = vcmask 1045509
    %v2971 = vsel %vm2970, %v2566, %v2969
    %vm2972 = vcmask 1046534
    %v2973 = vsel %vm2972, %v2724, %v2971
    %vm2974 = vcmask 1047559
    %v2975 = vsel %vm2974, %v2882, %v2973
    %v2976 = vsel %vm2962, %v2013, %v1855
    %v2977 = vsel %vm2964, %v2171, %v2976
    %v2978 = vsel %vm2966, %v2329, %v2977
    %v2979 = vsel %vm2968, %v2487, %v2978
    %v2980 = vsel %vm2970, %v2645, %v2979
    %v2981 = vsel %vm2972, %v2803, %v2980
    %v2982 = vsel %vm2974, %v2961, %v2981
    %2985 = vmatprep.subr.mxu0 %v1343
    %2986 = vmatpush1.msra.mxu0 %v1342
    %2987 = vmatprep.subr.mxu0 %v1340
    %2988 = vmatpush1.msra.mxu0 %v1339
    %2989 = vmatprep.subr.mxu0 %v1337
    %2990 = vmatpush1.msra.mxu0 %v1336
    %2991 = vmatprep.subr.mxu0 %v1334
    %2992 = vmatpush1.msra.mxu0 %v1333
    %2993 = vmatprep.subr.mxu0 %v1331
    %2994 = vmatpush1.msra.mxu0 %v1330
    %2995 = vmatprep.subr.mxu0 %v1328
    %2996 = vmatpush1.msra.mxu0 %v1327
    %2997 = vmatprep.subr.mxu0 %v1325
    %2998 = vmatpush1.msra.mxu0 %v1324
    %2999 = vmatprep.subr.mxu0 %v1322
    %3000 = vmatpush1.msra.mxu0 %v1321
    %3001 = vmatprep.subr.mxu0 %v1319
    %3002 = vmatpush1.msra.mxu0 %v1318
    %3003 = vmatprep.subr.mxu0 %v1316
    %3004 = vmatpush1.msra.mxu0 %v1315
    %3005 = vmatprep.subr.mxu0 %v1313
    %3006 = vmatpush1.msra.mxu0 %v1312
    %3007 = vmatprep.subr.mxu0 %v1310
    %3008 = vmatpush1.msra.mxu0 %v1309
    %3009 = vmatprep.subr.mxu0 %v1307
    %3010 = vmatpush1.msra.mxu0 %v1306
    %3011 = vmatprep.subr.mxu0 %v1304
    %3012 = vmatpush1.msra.mxu0 %v1303
    %3013 = vmatprep.subr.mxu0 %v1301
    %3014 = vmatpush1.msra.mxu0 %v1300
    %3015 = vmatprep.subr.mxu0 %v1298
    %3016 = vmatpush1.msra.mxu0 %v1297
    %3017 = vmatprep.subr.mxu0 %v1391
    %3018 = vmatpush2.msra.mxu0 %v1390
    %3019 = vmatprep.subr.mxu0 %v1388
    %3020 = vmatpush2.msra.mxu0 %v1387
    %3021 = vmatprep.subr.mxu0 %v1385
    %3022 = vmatpush2.msra.mxu0 %v1384
    %3023 = vmatprep.subr.mxu0 %v1382
    %3024 = vmatpush2.msra.mxu0 %v1381
    %3025 = vmatprep.subr.mxu0 %v1379
    %3026 = vmatpush2.msra.mxu0 %v1378
    %3027 = vmatprep.subr.mxu0 %v1376
    %3028 = vmatpush2.msra.mxu0 %v1375
    %3029 = vmatprep.subr.mxu0 %v1373
    %3030 = vmatpush2.msra.mxu0 %v1372
    %3031 = vmatprep.subr.mxu0 %v1370
    %3032 = vmatpush2.msra.mxu0 %v1369
    %3033 = vmatprep.subr.mxu0 %v1367
    %3034 = vmatpush2.msra.mxu0 %v1366
    %3035 = vmatprep.subr.mxu0 %v1364
    %3036 = vmatpush2.msra.mxu0 %v1363
    %3037 = vmatprep.subr.mxu0 %v1361
    %3038 = vmatpush2.msra.mxu0 %v1360
    %3039 = vmatprep.subr.mxu0 %v1358
    %3040 = vmatpush2.msra.mxu0 %v1357
    %3041 = vmatprep.subr.mxu0 %v1355
    %3042 = vmatpush2.msra.mxu0 %v1354
    %3043 = vmatprep.subr.mxu0 %v1352
    %3044 = vmatpush2.msra.mxu0 %v1351
    %3045 = vmatprep.subr.mxu0 %v1349
    %3046 = vmatpush2.msra.mxu0 %v1348
    %3047 = vmatprep.subr.mxu0 %v1346
    %3048 = vmatpush2.msra.mxu0 %v1345
    %3049 = vmatprep.mubr.f32.mxu0 %v2982
    %3050 = vmatmul.mubr.f32.gmra.mxu0 %v2975
    %v3051 = vpop.f32.mrf.mxu0
    %v3052 = vadd.f32 %v1398, %v3051
    %v3053 = vpop.f32.mrf.mxu0
    %v3054 = vadd.f32 %v1402, %v3053
    %3055 = vdwg.mxu0
    %3056 = vmatprep.subr.mxu0 0.0
    %3057 = vmatpush1.msra.mxu0 %v1344
    %3058 = vmatprep.subr.mxu0 0.0
    %3059 = vmatpush1.msra.mxu0 %v1341
    %3060 = vmatprep.subr.mxu0 0.0
    %3061 = vmatpush1.msra.mxu0 %v1338
    %3062 = vmatprep.subr.mxu0 0.0
    %3063 = vmatpush1.msra.mxu0 %v1335
    %3064 = vmatprep.subr.mxu0 0.0
    %3065 = vmatpush1.msra.mxu0 %v1332
    %3066 = vmatprep.subr.mxu0 0.0
    %3067 = vmatpush1.msra.mxu0 %v1329
    %3068 = vmatprep.subr.mxu0 0.0
    %3069 = vmatpush1.msra.mxu0 %v1326
    %3070 = vmatprep.subr.mxu0 0.0
    %3071 = vmatpush1.msra.mxu0 %v1323
    %3072 = vmatprep.subr.mxu0 0.0
    %3073 = vmatpush1.msra.mxu0 %v1320
    %3074 = vmatprep.subr.mxu0 0.0
    %3075 = vmatpush1.msra.mxu0 %v1317
    %3076 = vmatprep.subr.mxu0 0.0
    %3077 = vmatpush1.msra.mxu0 %v1314
    %3078 = vmatprep.subr.mxu0 0.0
    %3079 = vmatpush1.msra.mxu0 %v1311
    %3080 = vmatprep.subr.mxu0 0.0
    %3081 = vmatpush1.msra.mxu0 %v1308
    %3082 = vmatprep.subr.mxu0 0.0
    %3083 = vmatpush1.msra.mxu0 %v1305
    %3084 = vmatprep.subr.mxu0 0.0
    %3085 = vmatpush1.msra.mxu0 %v1302
    %3086 = vmatprep.subr.mxu0 0.0
    %3087 = vmatpush1.msra.mxu0 %v1299
    %3088 = vmatprep.subr.mxu0 0.0
    %3089 = vmatpush2.msra.mxu0 %v1392
    %3090 = vmatprep.subr.mxu0 0.0
    %3091 = vmatpush2.msra.mxu0 %v1389
    %3092 = vmatprep.subr.mxu0 0.0
    %3093 = vmatpush2.msra.mxu0 %v1386
    %3094 = vmatprep.subr.mxu0 0.0
    %3095 = vmatpush2.msra.mxu0 %v1383
    %3096 = vmatprep.subr.mxu0 0.0
    %3097 = vmatpush2.msra.mxu0 %v1380
    %3098 = vmatprep.subr.mxu0 0.0
    %3099 = vmatpush2.msra.mxu0 %v1377
    %3100 = vmatprep.subr.mxu0 0.0
    %3101 = vmatpush2.msra.mxu0 %v1374
    %3102 = vmatprep.subr.mxu0 0.0
    %3103 = vmatpush2.msra.mxu0 %v1371
    %3104 = vmatprep.subr.mxu0 0.0
    %3105 = vmatpush2.msra.mxu0 %v1368
    %3106 = vmatprep.subr.mxu0 0.0
    %3107 = vmatpush2.msra.mxu0 %v1365
    %3108 = vmatprep.subr.mxu0 0.0
    %3109 = vmatpush2.msra.mxu0 %v1362
    %3110 = vmatprep.subr.mxu0 0.0
    %3111 = vmatpush2.msra.mxu0 %v1359
    %3112 = vmatprep.subr.mxu0 0.0
    %3113 = vmatpush2.msra.mxu0 %v1356
    %3114 = vmatprep.subr.mxu0 0.0
    %3115 = vmatpush2.msra.mxu0 %v1353
    %3116 = vmatprep.subr.mxu0 0.0
    %3117 = vmatpush2.msra.mxu0 %v1350
    %3118 = vmatprep.subr.mxu0 0.0
    %3119 = vmatpush2.msra.mxu0 %v1347
    %3120 = vmatprep.mubr.f32.mxu0 %v2982
    %3121 = vmatmul.mubr.f32.gmra.mxu0 %v2975
    %v3122 = vpop.f32.mrf.mxu0
    %v3123 = vadd.f32 %v1406, %v3122
    %v3124 = vpop.f32.mrf.mxu0
    %3125 = vdwg.mxu0
    %v3126 = vadd.s32 %v1667, 128
    %v3127 = vadd.s32 %v1667, 256
    %vm3128 = vcmp.lt.s32.totalorder %v1667, 2
    %vm3129 = vcmp.lt.s32.totalorder %v3126, 2
    %vm3130 = vcmp.lt.s32.totalorder %v3127, 2
    %vm3131 = vcmp.ge.s32.totalorder %v1667, 2
    %vm3132 = vcmp.ge.s32.totalorder %v3126, 2
    %vm3133 = vcmp.ge.s32.totalorder %v3127, 2
    %vm3134 = vcmp.lt.s32.totalorder %v1667, 10
    %vm3135 = vcmp.lt.s32.totalorder %v3126, 10
    %vm3136 = vcmp.lt.s32.totalorder %v3127, 10
    %vm3137 = vmand %vm3131, %vm3134
    %vm3138 = vmand %vm3132, %vm3135
    %vm3139 = vmand %vm3133, %vm3136
    %vm3140 = vcmp.ge.s32.totalorder %v1667, 10
    %vm3141 = vcmp.ge.s32.totalorder %v3126, 10
    %vm3142 = vcmp.ge.s32.totalorder %v3127, 10
    %vm3143 = vcmp.lt.s32.totalorder %v1667, 266
    %vm3144 = vcmp.lt.s32.totalorder %v3126, 266
    %vm3145 = vcmp.lt.s32.totalorder %v3127, 266
    %vm3146 = vmand %vm3140, %vm3143
    %vm3147 = vmand %vm3141, %vm3144
    %vm3148 = vmand %vm3142, %vm3145
    %v3149 = vsel %vm3128, %v3052, -inf
    %v3150 = vsel %vm3129, %v3054, -inf
    %v3151 = vsel %vm3130, %v3123, -inf
    %v3152 = vmax.f32 %v3149, %v3150
    %v3153 = vmax.f32 %v3152, %v3151
    %3154 = vmax.xlane.f32.xlu0 %v3153
    %v3155 = vpop.xlane.xlu0 %3154
    %v3156 = vsub.f32 %v3149, %v3155
    %v3157 = vsub.f32 %v3150, %v3155
    %v3158 = vsub.f32 %v3151, %v3155
    %v3159 = vmul.f32 %v3156, 1.442695
    %v3160 = vpow.pop %v3159
    %v3161 = vmul.f32 %v3157, 1.442695
    %v3162 = vpow.pop %v3161
    %v3163 = vmul.f32 %v3158, 1.442695
    %v3164 = vpow.pop %v3163
    %v3165 = vadd.f32 %v3160, %v3162
    %v3166 = vadd.f32 %v3165, %v3164
    %3167 = vadd.xlane.f32.xlu0 %v3166
    %v3168 = vpop.xlane.xlu0 %3167
    %v3169 = vrcp.pop %v3168
    %v3170 = vmul.f32 %v3160, %v3169
    %v3171 = vmul.f32 %v3162, %v3169
    %v3172 = vmul.f32 %v3164, %v3169
    %v3173 = vsel %vm3137, %v3052, 0.0
    %v3174 = vsel %vm3138, %v3054, 0.0
    %v3175 = vsel %vm3139, %v3123, 0.0
    %v3176 = vsel %vm3146, %v3052, 0.0
    %v3177 = vsel %vm3147, %v3054, 0.0
    %v3178 = vsel %vm3148, %v3123, 0.0
    %v3179 = vmul.f32 %v3176, %v3176
    %v3180 = vmul.f32 %v3177, %v3177
    %v3181 = vmul.f32 %v3178, %v3178
    %v3182 = vadd.f32 %v3179, %v3180
    %v3183 = vadd.f32 %v3182, %v3181
    %3184 = vadd.xlane.f32.xlu0 %v3183
    %v3185 = vpop.xlane.xlu0 %3184
    %v3186 = vmax.f32 %v3185, 1e-24
    %v3187 = vrsqrt.pop %v3186
    %v3188 = vmul.f32 %v3176, %v3187
    %v3189 = vmul.f32 %v3177, %v3187
    %v3190 = vmul.f32 %v3178, %v3187
    %v3191 = vadd.f32 %v3170, %v3173
    %v3192 = vadd.f32 %v3171, %v3174
    %v3193 = vadd.f32 %v3172, %v3175
    %v3194 = vadd.f32 %v3191, %v3188
    %v3195 = vadd.f32 %v3192, %v3189
    %v3196 = vadd.f32 %v3193, %v3190
    %3197 = vst [vmem:[#allocation2] sm:$0xff] %v3194
    %3198 = vst [vmem:[#allocation2 + $0x8] sm:$0xff] %v3195
    %3199 = vst [vmem:[#allocation2 + $0x10] sm:$0xff] %v3196
    // Predicated region
    $region14: #{tpu_custom_call.1} parent=1 // pred_check
      _
    $region15: #{tpu_custom_call.1} parent=1 // pred_check_branch
      %3201 = sbr.rel (0) target = $region17
    $region16: #{tpu_custom_call.1} parent=1 // pred_region
      %s3203 = ssub.s32 384, 384
      %3204 = vsyncadd [#allocation3], %s3203
      %s3206 = sshll.u32 [#allocation2], 4
      %s3207 = int_to_ptr.vmem [resolvable:$true] %s3206
      %3209 = dma.vmem_to_hbm [thread:$0]  %s3207, 384, %s3, [#allocation3]
    $region17: #{tpu_custom_call.1} parent=1 // pred_fallthru
      _
    // Predicated region
    $region18: #{tpu_custom_call.1} parent=1 // pred_check
      _
    $region19: #{tpu_custom_call.1} parent=1 // pred_check_branch
      %3211 = sbr.rel (0) target = $region21
    $region20: #{tpu_custom_call.1} parent=1 // pred_region
      %3212 = dma.done [#allocation3], 384
    $region21: #{tpu_custom_call.1} parent=1 // pred_fallthru
      _
    %3213 = vsyncpa [#allocation3], 1

</llo_original>
